<compile_context>
chip_gen: v6e
topology: v6e:2x2x1
jax: 0.10.0
libtpu: 0.0.40
codegen_flags: <defaults>
</compile_context>

<pallas_src>
import jax
import jax.numpy as jnp
from jax.experimental import pallas as pl
from jax.experimental.pallas import tpu as pltpu

# ---- small, deterministic hyper-params consistent with the module's forward ----
HEIGHT, WIDTH, CHANNELS = 24, 32, 3      # scaled-down stand-in for (240, 320, 3)
NUM_CLIPS = 8
TOP_K = 5
NUM_CLASSES = 101
MLP_HIDDEN = 512
STEM_CH = 16                             # conv_stem: Conv2d(3, 16, k=3, s=2, p=1, bias=False)
FEAT_DIM = 1280                          # feature width the GhostNet backbone would emit
FC1_OUT = 101
FC1_PAD = 128                            # lane-dense padding of the 101-wide fc1 output
CLS_PAD = 128                            # lane-dense padding of the 101-class head output
LSTM_HIDDEN = 128
KK = CHANNELS * 9                        # im2col patch width (3*3*3 = 27)
KK_PAD = 32                              # pad patch dim 27 -> 32 (nicer lane packing)
SCORE_LANES = 128                        # lane-dense width of the importance-score output


def _vmem():
    return pl.BlockSpec(memory_space=pltpu.MemorySpace.VMEM)


# --------------------------------------------------------------------------------------
# Kernel 1: per-frame importance MLP  (Linear(C*H*W -> 512) -> ReLU -> Linear(512 -> 1))
# One call over all B*T frames, K-tiled along the input-feature axis:
#   grid=(d_in // tk,) marked "arbitrary", f32 accumulator scratch, bias/ReLU/512->1
#   reduction applied only on the last K step.  The 512->1 layer is a VPU multiply +
#   lane reduction; the score is broadcast across 128 lanes so the store is lane-dense.
# --------------------------------------------------------------------------------------
def _mlp_score_kernel(x_ref, w1_ref, b1_ref, w2_ref, b2_ref, o_ref, acc_ref):
    k = pl.program_id(0)

    @pl.when(k == 0)
    def _():
        acc_ref[...] = jnp.zeros_like(acc_ref)

    acc_ref[...] += jnp.dot(x_ref[...], w1_ref[...], preferred_element_type=jnp.float32)

    @pl.when(k == pl.num_programs(0) - 1)
    def _():
        h = jnp.maximum(acc_ref[...] + b1_ref[...], 0.0)                    # (n, 512)
        s = jnp.sum(h * w2_ref[...], axis=-1, keepdims=True) + b2_ref[...]  # (n, 1)
        o_ref[...] = jnp.broadcast_to(s, o_ref.shape)                       # lane-dense store


def _pick_k_tile(d_in, cap):
    """Largest multiple-of-128 divisor of d_in not exceeding `cap`."""
    best, t = 128, 128
    while t <= min(d_in, cap):
        if d_in % t == 0:
            best = t
        t += 128
    return best


def mlp_scores(frames_flat_bf16, w1_bf16, b1, w2_row, b2):
    n, d_in = frames_flat_bf16.shape
    # TODO(synk): at real resolution (d_in = 230400, w1 ~225 MiB bf16) pick tk per VMEM
    #             budget: ~8192 on v7x (64 MiB VMEM), 16K-32K on v6e/v5e (128 MiB), set
    #             vmem_limit_bytes explicitly and consider pl.Buffered(3) on the w1 spec;
    #             the kernel is weight-streaming / HBM-bound there.
    tk = _pick_k_tile(d_in, cap=2048)      # toy size: 2304 -> tk=1152 -> 2 K steps
    return pl.pallas_call(
        _mlp_score_kernel,
        out_shape=jax.ShapeDtypeStruct((n, SCORE_LANES), jnp.float32),
        grid=(d_in // tk,),
        in_specs=[
            pl.BlockSpec((n, tk), lambda k: (0, k)),
            pl.BlockSpec((tk, MLP_HIDDEN), lambda k: (k, 0)),
            pl.BlockSpec((1, MLP_HIDDEN), lambda k: (0, 0)),
            pl.BlockSpec((1, MLP_HIDDEN), lambda k: (0, 0)),
            pl.BlockSpec((1, 1), lambda k: (0, 0)),
        ],
        out_specs=pl.BlockSpec((n, SCORE_LANES), lambda k: (0, 0)),
        scratch_shapes=[pltpu.VMEM((n, MLP_HIDDEN), jnp.float32)],
        compiler_params=pltpu.CompilerParams(dimension_semantics=("arbitrary",)),
    )(frames_flat_bf16, w1_bf16, b1, w2_row, b2)


# --------------------------------------------------------------------------------------
# Kernel 2: fused CNN feature stand-in + fc1, single grid-less call with batch folded
# into the matmul M dimension:
#   (B*K*P, 32) @ (32, 16) conv_stem -> ReLU -> GAP over P -> (B*K, 16) @ (16, 1280)
#   -> (B*K, 1280) @ (1280, 128) fc1 (padded 101 -> 128, lane-dense output).
# TODO(synk): the timm 'ghostnet_100' backbone (ghost bottlenecks, SE blocks, BN) has no
#             clean Pallas equivalent; only the replaced conv_stem + GAP is real, with a
#             linear stand-in projecting 16 stem channels to the 1280-d feature.
# TODO(synk): on v7x split B*K across a 2-wide "parallel" grid (pad rows to a multiple of
#             8 per block) so both TensorCores are fed; single-TC chips need no grid here.
# --------------------------------------------------------------------------------------
def _backbone_fc1_kernel(pat_ref, wc_ref, wp_ref, bp_ref, wf_ref, bf_ref, o_ref):
    mp, _ = pat_ref.shape                                                  # (B*K*P, 32)
    bk = o_ref.shape[0]                                                    # B*K
    p = mp // bk
    conv = jnp.dot(pat_ref[...], wc_ref[...], preferred_element_type=jnp.float32)
    conv = jnp.maximum(conv, 0.0)                                          # stem activation
    feat = jnp.mean(conv.reshape(bk, p, STEM_CH), axis=1)                  # GAP -> (B*K, 16)
    feat = jnp.dot(feat.astype(jnp.bfloat16), wp_ref[...],
                   preferred_element_type=jnp.float32) + bp_ref[...]       # (B*K, 1280)
    logits = jnp.dot(feat.astype(jnp.bfloat16), wf_ref[...],
                     preferred_element_type=jnp.float32) + bf_ref[...]     # (B*K, 128)
    o_ref[...] = logits


def backbone_fc1(patches2d, wc, wp, bp, wf, bf, bk):
    return pl.pallas_call(
        _backbone_fc1_kernel,
        out_shape=jax.ShapeDtypeStruct((bk, FC1_PAD), jnp.float32),
        in_specs=[_vmem()] * 6,
        out_specs=_vmem(),
    )(patches2d, wc, wp, bp, wf, bf)


# --------------------------------------------------------------------------------------
# Kernel 3: LSTM(128(pad of 101) -> 128, batch_first) over K steps + mean over time +
#           fc2(128 -> 128(pad of 101)).  Gate order matches PyTorch: i, f, g, o.
#           The input-to-hidden matmuls are hoisted out of the recurrence into a VMEM
#           scratch (one small matmul per step, all independent); only the
#           (B,128)@(128,512) hidden matmul stays on the sequential critical path.
#           bf16 matmul operands, f32 state/accumulation.
# --------------------------------------------------------------------------------------
def _lstm_head_kernel(x_ref, wih_ref, whh_ref, b_ref, wfc_ref, bfc_ref, o_ref, gx_ref):
    steps, bsz, _ = x_ref.shape            # x_ref: (K, B, 128)
    hdim = whh_ref.shape[0]

    # Hoisted input-to-hidden matmuls (off the recurrent critical path).
    for t in range(steps):                 # static, K is small
        gx_ref[t] = (jnp.dot(x_ref[t].astype(jnp.bfloat16), wih_ref[...],
                             preferred_element_type=jnp.float32) + b_ref[...])

    def body(t, carry):
        h, c, hsum = carry
        gates = gx_ref[t] + jnp.dot(h.astype(jnp.bfloat16), whh_ref[...],
                                    preferred_element_type=jnp.float32)
        i_g = jax.nn.sigmoid(gates[:, 0 * hdim:1 * hdim])
        f_g = jax.nn.sigmoid(gates[:, 1 * hdim:2 * hdim])
        g_g = jnp.tanh(gates[:, 2 * hdim:3 * hdim])
        o_g = jax.nn.sigmoid(gates[:, 3 * hdim:4 * hdim])
        c = f_g * c + i_g * g_g
        h = o_g * jnp.tanh(c)
        return h, c, hsum + h

    h0 = jnp.zeros((bsz, hdim), jnp.float32)
    _, _, hsum = jax.lax.fori_loop(0, steps, body, (h0, h0, h0), unroll=True)
    hmean = hsum * (1.0 / float(steps))                    # lstm_output.mean(dim=1)
    o_ref[...] = jnp.dot(hmean.astype(jnp.bfloat16), wfc_ref[...],
                         preferred_element_type=jnp.float32) + bfc_ref[...]


def lstm_head(seq_tbf, wih, whh, b, wfc, bfc):
    steps, bsz, _ = seq_tbf.shape
    # TODO(synk): on v7x, split the batch over a 2-wide "parallel" grid once B grows so
    #             the second TensorCore is not idle during the recurrence.
    return pl.pallas_call(
        _lstm_head_kernel,
        out_shape=jax.ShapeDtypeStruct((bsz, CLS_PAD), jnp.float32),
        in_specs=[_vmem()] * 6,
        out_specs=_vmem(),
        scratch_shapes=[pltpu.VMEM((steps, bsz, 4 * LSTM_HIDDEN), jnp.float32)],
    )(seq_tbf, wih, whh, b, wfc, bfc)


# --------------------------------------------------------------------------------------
# Glue: im2col for the 3x3/stride-2/pad-1 stem conv (patch layout = (Cin, kh, kw),
# matching PyTorch Conv2d weight (out, in, kh, kw) flattened per output channel).
# --------------------------------------------------------------------------------------
def im2col(x, k=3, stride=2, pad=1):
    n, c, h, w = x.shape
    xp = jnp.pad(x, ((0, 0), (0, 0), (pad, pad), (pad, pad)))
    oh = (h + 2 * pad - k) // stride + 1
    ow = (w + 2 * pad - k) // stride + 1
    cols = []
    for di in range(k):
        for dj in range(k):
            cols.append(xp[:, :, di:di + stride * oh:stride, dj:dj + stride * ow:stride])
    patches = jnp.stack(cols, axis=-1)                  # (N, C, OH, OW, k*k)
    patches = patches.transpose(0, 2, 3, 1, 4)          # (N, OH, OW, C, k*k)
    return patches.reshape(n, oh * ow, c * k * k)


# --------------------------------------------------------------------------------------
# Parameters (deterministic synthetic init; shapes mirror the module's layers)
# --------------------------------------------------------------------------------------
def init_params(key):
    ks = jax.random.split(key, 8)
    d_in = CHANNELS * HEIGHT * WIDTH
    s = 0.02
    return {
        "mlp_w1": s * jax.random.normal(ks[0], (d_in, MLP_HIDDEN), jnp.float32),
        "mlp_b1": jnp.zeros((1, MLP_HIDDEN), jnp.float32),
        "mlp_w2": s * jax.random.normal(ks[1], (MLP_HIDDEN, 1), jnp.float32),
        "mlp_b2": jnp.zeros((1, 1), jnp.float32),
        "stem_w": s * jax.random.normal(ks[2], (KK, STEM_CH), jnp.float32),
        "proj_w": s * jax.random.normal(ks[3], (STEM_CH, FEAT_DIM), jnp.float32),
        "proj_b": jnp.zeros((1, FEAT_DIM), jnp.float32),
        "fc1_w": s * jax.random.normal(ks[4], (FEAT_DIM, FC1_OUT), jnp.float32),
        "fc1_b": jnp.zeros((1, FC1_OUT), jnp.float32),
        # combined bias represents PyTorch's (b_ih + b_hh)
        "lstm_wih": s * jax.random.normal(ks[5], (FC1_OUT, 4 * LSTM_HIDDEN), jnp.float32),
        "lstm_whh": s * jax.random.normal(ks[6], (LSTM_HIDDEN, 4 * LSTM_HIDDEN), jnp.float32),
        "lstm_b": jnp.zeros((1, 4 * LSTM_HIDDEN), jnp.float32),
        "fc2_w": s * jax.random.normal(ks[7], (LSTM_HIDDEN, NUM_CLASSES), jnp.float32),
        "fc2_b": jnp.zeros((1, NUM_CLASSES), jnp.float32),
    }


# --------------------------------------------------------------------------------------
# Forward pass (mirrors MyModel.forward); 3 pallas_calls total.
# --------------------------------------------------------------------------------------
def forward(params, x):
    # x: (B, C, T, H, W)  ->  (B, T, C, H, W)
    x = jnp.transpose(x, (0, 2, 1, 3, 4))
    b, t, c, h, w = x.shape
    assert h == HEIGHT and w == WIDTH

    # 1) per-frame importance scores (single K-tiled Pallas call, bf16 matmul operands,
    #    lane-dense (n, 128) score output sliced to a single column in the wrapper)
    frames_flat = x.reshape(b * t, c * h * w)
    scores_pad = mlp_scores(
        frames_flat.astype(jnp.bfloat16),
        params["mlp_w1"].astype(jnp.bfloat16),
        params["mlp_b1"],
        params["mlp_w2"].reshape(1, MLP_HIDDEN),
        params["mlp_b2"],
    )
    scores = scores_pad[:, 0].reshape(b, t)

    # 2) top-k frame selection (glue; tie-breaking may differ from torch.topk)
    # TODO(synk): at real resolution, pass idx via PrefetchScalarGridSpec and gather the
    #             selected frames through a data-dependent index_map (pl.Element row block)
    #             instead of materializing this HBM gather copy + f32 im2col.
    _, idx = jax.lax.top_k(scores, TOP_K)                       # (B, K), sorted desc
    selected = x[jnp.arange(b)[:, None], idx]                   # (B, K, C, H, W)
    frames = selected.reshape(b * TOP_K, c, h, w)

    # 3+4) fused backbone stand-in (conv_stem + GAP + 16->1280 projection) + fc1 (padded
    #      to 128 output lanes); batch folded into the matmul M dimension, no grid.
    patches = im2col(frames)                                    # (B*K, OH*OW, 27)
    patches = jnp.pad(patches, ((0, 0), (0, 0), (0, KK_PAD - KK)))
    p_spatial = patches.shape[1]
    patches2d = patches.reshape(b * TOP_K * p_spatial, KK_PAD).astype(jnp.bfloat16)
    stem_w = jnp.pad(params["stem_w"], ((0, KK_PAD - KK), (0, 0))).astype(jnp.bfloat16)
    fc1_w = jnp.pad(params["fc1_w"], ((0, 0), (0, FC1_PAD - FC1_OUT))).astype(jnp.bfloat16)
    fc1_b = jnp.pad(params["fc1_b"], ((0, 0), (0, FC1_PAD - FC1_OUT)))
    seq = backbone_fc1(
        patches2d, stem_w,
        params["proj_w"].astype(jnp.bfloat16), params["proj_b"],
        fc1_w, fc1_b, b * TOP_K,
    )                                                           # (B*K, 128), cols 101..127 = 0

    # 5) LSTM + temporal mean + fc2 (padded to 128 classes), fused in one Pallas kernel.
    #    Input arranged time-major (K, B, 128) so the hoisted gx scratch can be indexed
    #    by the dynamic step index along its leading axis.
    seq_tbf = seq.reshape(b, TOP_K, FC1_PAD).transpose(1, 0, 2)          # (K, B, 128)
    wih = jnp.pad(params["lstm_wih"],
                  ((0, FC1_PAD - FC1_OUT), (0, 0))).astype(jnp.bfloat16)  # zero pad rows
    wfc = jnp.pad(params["fc2_w"],
                  ((0, 0), (0, CLS_PAD - NUM_CLASSES))).astype(jnp.bfloat16)
    bfc = jnp.pad(params["fc2_b"], ((0, 0), (0, CLS_PAD - NUM_CLASSES)))
    out_pad = lstm_head(seq_tbf, wih,
                        params["lstm_whh"].astype(jnp.bfloat16),
                        params["lstm_b"], wfc, bfc)             # (B, 128)
    return out_pad[:, :NUM_CLASSES]                             # (B, 101)


if __name__ == "__main__":
    key = jax.random.PRNGKey(0)
    k_x, k_p = jax.random.split(key)
    # input matches the module's expected layout before permute: (B, C, T, H, W)
    x = jax.random.normal(k_x, (2, CHANNELS, NUM_CLIPS, HEIGHT, WIDTH), jnp.float32)
    params = init_params(k_p)
    out = forward(params, x)
    out = jax.block_until_ready(out)
    assert out.shape == (2, NUM_CLASSES), out.shape
    assert bool(jnp.all(jnp.isfinite(out)))
    print("KERNEL_OK")
</pallas_src>

<mosaic_0001>
module attributes {stable_mosaic.version = 11 : i64} {
  func.func @_mlp_score_kernel(%arg0: i32, %arg1: memref<16x1152xbf16, #tpu.memory_space<vmem>>, %arg2: memref<1152x512xbf16, #tpu.memory_space<vmem>>, %arg3: memref<1x512xf32, #tpu.memory_space<vmem>>, %arg4: memref<1x512xf32, #tpu.memory_space<vmem>>, %arg5: memref<1x1xf32, #tpu.memory_space<vmem>>, %arg6: memref<16x128xf32, #tpu.memory_space<vmem>>, %arg7: memref<16x512xf32, #tpu.memory_space<vmem>>) attributes {dimension_semantics = [#tpu.dimension_semantics<arbitrary>], iteration_bounds = array<i64: 2>, scalar_prefetch = 0 : i64, scratch_operands = 1 : i64, tpu.core_type = #tpu.core_type<tc>, window_params = [{transform_indices = @transform_0, window_bounds = array<i64: 16, 1152>}, {transform_indices = @transform_1, window_bounds = array<i64: 1152, 512>}, {pipeline_mode = #tpu.pipeline_mode<synchronous>, transform_indices = @transform_2, window_bounds = array<i64: 1, 512>}, {pipeline_mode = #tpu.pipeline_mode<synchronous>, transform_indices = @transform_3, window_bounds = array<i64: 1, 512>}, {pipeline_mode = #tpu.pipeline_mode<synchronous>, transform_indices = @transform_4, window_bounds = array<i64: 1, 1>}, {pipeline_mode = #tpu.pipeline_mode<synchronous>, transform_indices = @transform_5, window_bounds = array<i64: 16, 128>}]} {
    %c0_i32 = arith.constant 0 : i32
    %0 = arith.cmpi eq, %arg0, %c0_i32 : i32
    %1 = arith.extui %0 : i1 to i32
    %c0_i32_0 = arith.constant 0 : i32
    %2 = arith.cmpi ne, %1, %c0_i32_0 : i32
    scf.if %2 {
      %cst_9 = arith.constant 0.000000e+00 : f32
      %12 = vector.broadcast %cst_9 : f32 to vector<16x512xf32>
      %c0_10 = arith.constant 0 : index
      %c0_11 = arith.constant 0 : index
      %13 = vector.load %arg7[%c0_10, %c0_11] : memref<16x512xf32, #tpu.memory_space<vmem>>, vector<16x512xf32>
      tpu.vector_store %arg7[%c0_10, %c0_11], %12 {strides = array<i32>} : memref<16x512xf32, #tpu.memory_space<vmem>>, vector<16x512xf32>,
    } else {
    }
    %c0 = arith.constant 0 : index
    %c0_1 = arith.constant 0 : index
    %3 = vector.load %arg7[%c0, %c0_1] : memref<16x512xf32, #tpu.memory_space<vmem>>, vector<16x512xf32>
    %c0_2 = arith.constant 0 : index
    %c0_3 = arith.constant 0 : index
    %4 = vector.load %arg1[%c0_2, %c0_3] : memref<16x1152xbf16, #tpu.memory_space<vmem>>, vector<16x1152xbf16>
    %c0_4 = arith.constant 0 : index
    %c0_5 = arith.constant 0 : index
    %5 = vector.load %arg2[%c0_4, %c0_5] : memref<1152x512xbf16, #tpu.memory_space<vmem>>, vector<1152x512xbf16>
    %cst = arith.constant dense<0.000000e+00> : vector<16x512xf32>
    %6 = tpu.matmul %4, %5, %cst {dimension_numbers = #tpu.dot_dimension_numbers<[1], [0], [0], [1], [0, 0, 1, 1], [], []>} : vector<16x1152xbf16>, vector<1152x512xbf16>, vector<16x512xf32> -> vector<16x512xf32>
    %7 = arith.addf %3, %6 : vector<16x512xf32>
    %c0_6 = arith.constant 0 : index
    %c0_7 = arith.constant 0 : index
    %8 = vector.load %arg7[%c0_6, %c0_7] : memref<16x512xf32, #tpu.memory_space<vmem>>, vector<16x512xf32>
    tpu.vector_store %arg7[%c0_6, %c0_7], %7 {strides = array<i32>} : memref<16x512xf32, #tpu.memory_space<vmem>>, vector<16x512xf32>,
    %c1_i32 = arith.constant 1 : i32
    %9 = arith.cmpi eq, %arg0, %c1_i32 : i32
    %10 = arith.extui %9 : i1 to i32
    %c0_i32_8 = arith.constant 0 : i32
    %11 = arith.cmpi ne, %10, %c0_i32_8 : i32
    scf.if %11 {
      %c0_9 = arith.constant 0 : index
      %c0_10 = arith.constant 0 : index
      %12 = vector.load %arg7[%c0_9, %c0_10] : memref<16x512xf32, #tpu.memory_space<vmem>>, vector<16x512xf32>
      %c0_11 = arith.constant 0 : index
      %c0_12 = arith.constant 0 : index
      %13 = vector.load %arg3[%c0_11, %c0_12] : memref<1x512xf32, #tpu.memory_space<vmem>>, vector<1x512xf32>
      %14 = vector.broadcast %13 : vector<1x512xf32> to vector<16x512xf32>
      %15 = arith.addf %12, %14 : vector<16x512xf32>
      %cst_13 = arith.constant 0.000000e+00 : f32
      %16 = vector.broadcast %cst_13 : f32 to vector<16x512xf32>
      %17 = arith.maximumf %15, %16 : vector<16x512xf32>
      %c0_14 = arith.constant 0 : index
      %c0_15 = arith.constant 0 : index
      %18 = vector.load %arg4[%c0_14, %c0_15] : memref<1x512xf32, #tpu.memory_space<vmem>>, vector<1x512xf32>
      %19 = vector.broadcast %18 : vector<1x512xf32> to vector<16x512xf32>
      %20 = arith.mulf %17, %19 : vector<16x512xf32>
      %cst_16 = arith.constant dense<0.000000e+00> : vector<16xf32>
      %21 = vector.multi_reduction <add>, %20, %cst_16 [1] : vector<16x512xf32> to vector<16xf32>
      %22 = vector.shape_cast %21 : vector<16xf32> to vector<16x1xf32>
      %c0_17 = arith.constant 0 : index
      %c0_18 = arith.constant 0 : index
      %23 = vector.load %arg5[%c0_17, %c0_18] : memref<1x1xf32, #tpu.memory_space<vmem>>, vector<1x1xf32>
      %24 = vector.broadcast %23 : vector<1x1xf32> to vector<16x1xf32>
      %25 = arith.addf %22, %24 : vector<16x1xf32>
      %26 = vector.shape_cast %25 : vector<16x1xf32> to vector<16x1xf32>
      %27 = vector.broadcast %26 : vector<16x1xf32> to vector<16x128xf32>
      %c0_19 = arith.constant 0 : index
      %c0_20 = arith.constant 0 : index
      %28 = vector.load %arg6[%c0_19, %c0_20] : memref<16x128xf32, #tpu.memory_space<vmem>>, vector<16x128xf32>
      tpu.vector_store %arg6[%c0_19, %c0_20], %27 {strides = array<i32>} : memref<16x128xf32, #tpu.memory_space<vmem>>, vector<16x128xf32>,
    } else {
    }
    return
  }
  func.func @transform_0(%arg0: i32) -> (i32, i32) {
    %c0_i32 = arith.constant 0 : i32
    %c0_i32_0 = arith.constant 0 : i32
    return %c0_i32, %arg0 : i32, i32
  }
  func.func @transform_1(%arg0: i32) -> (i32, i32) {
    %c0_i32 = arith.constant 0 : i32
    %c0_i32_0 = arith.constant 0 : i32
    return %arg0, %c0_i32 : i32, i32
  }
  func.func @transform_2(%arg0: i32) -> (i32, i32) {
    %c0_i32 = arith.constant 0 : i32
    %c0_i32_0 = arith.constant 0 : i32
    %c0_i32_1 = arith.constant 0 : i32
    return %c0_i32, %c0_i32_0 : i32, i32
  }
  func.func @transform_3(%arg0: i32) -> (i32, i32) {
    %c0_i32 = arith.constant 0 : i32
    %c0_i32_0 = arith.constant 0 : i32
    %c0_i32_1 = arith.constant 0 : i32
    return %c0_i32, %c0_i32_0 : i32, i32
  }
  func.func @transform_4(%arg0: i32) -> (i32, i32) {
    %c0_i32 = arith.constant 0 : i32
    %c0_i32_0 = arith.constant 0 : i32
    %c0_i32_1 = arith.constant 0 : i32
    return %c0_i32, %c0_i32_0 : i32, i32
  }
  func.func @transform_5(%arg0: i32) -> (i32, i32) {
    %c0_i32 = arith.constant 0 : i32
    %c0_i32_0 = arith.constant 0 : i32
    %c0_i32_1 = arith.constant 0 : i32
    return %c0_i32, %c0_i32_0 : i32, i32
  }
}

</mosaic_0001>

<llo_original>
// kernel: tpu_custom_call.1
$region0: #{tpu_custom_call.1}
  #allocation0 [shape = 'u32[]', space=smem, size = 0x4, offset = 0x4, fixed_abs, tag = 'smem constant byte address 0x4 - core index']
  #allocation1 [shape = 'u32[144,128]{1,0:T(1,128)}', space=vmem, size = 0x12000, scoped, tag = 'internal scratch']
  #allocation2 [shape = 'f32[16,512]{1,0:T(8,128)}', space=vmem, size = 0x8000, scoped, tag = 'scratch operand']
  #allocation3 [shape = 'f32[1,1]{1,0:T(1,128)S(1)}', space=vmem, size = 0x200, scoped, tag = 'scoped memory for tpu_custom_call.1']
  %s0 = inlined_call_operand.hbm [shape: bf16[16,2304], index: 0, kind: input, shape index: {}]
  %s1 = inlined_call_operand.hbm [shape: bf16[2304,512], index: 1, kind: input, shape index: {}]
  %s2 = inlined_call_operand.hbm [shape: f32[1,512], index: 2, kind: input, shape index: {}]
  %s3 = inlined_call_operand.hbm [shape: f32[1,512], index: 3, kind: input, shape index: {}]
  %s4 = inlined_call_operand.<no memory space> [shape: f32[1,1], index: 4, kind: input, shape index: {}]
  %s5 = inlined_call_operand.hbm [shape: f32[16,128], index: 5, kind: output, shape index: {}]
  %s6 = sld [smem:[#allocation0]]
  $region77: #{tpu_custom_call.1} parent=0
    _
  %s8 = ssub.s32 1, %s6
  %s9 = scalar_select 0, %s8, %s6
  %v10 = vstv %s4
  %11 = vst [vmem:[#allocation3] sm:$0x1] %v10
  $region1: #{tpu_custom_call.1} parent=0
    #allocation4 [shape = 'u8[73728]{0}', space=vmem, size = 0x12000, scoped, tag = 'input window, operand 0']
    #allocation5 [shape = 's32[2]{0}', space=sflag, size = 0x8, scoped, tag = 'scoped memory for tpu_custom_call.1']
    #allocation6 [shape = 's32[2]{0}', space=sflag, size = 0x8, scoped, tag = 'scoped memory for tpu_custom_call.1']
    #allocation7 [shape = 'u8[2359296]{0}', space=vmem, size = 0x240000, scoped, tag = 'input window, operand 1']
    #allocation8 [shape = 's32[2]{0}', space=sflag, size = 0x8, scoped, tag = 'scoped memory for tpu_custom_call.1']
    #allocation9 [shape = 'u8[2048]{0}', space=vmem, size = 0x800, scoped, tag = 'input window, operand 2, single buffered']
    #allocation10 [shape = 'u8[2048]{0}', space=vmem, size = 0x800, scoped, tag = 'input window, operand 3, single buffered']
    #allocation11 [shape = 's32[1]{0}', space=sflag, size = 0x4, scoped, tag = 'scoped memory for tpu_custom_call.1']
    #allocation12 [shape = 'u8[8192]{0}', space=vmem, size = 0x2000, scoped, tag = 'output window, operand 0, single buffered']
    %12 = vsyncpa [#allocation5], 0
    %s13 = scalar_lea.sflag [#allocation5], 1
    %14 = vsyncpa %s13, 0
    %15 = vsyncpa [#allocation8], 0
    %s16 = scalar_lea.sflag [#allocation8], 1
    %17 = vsyncpa %s16, 0
    %18 = vsyncpa [#allocation11], 0
    %19 = vsyncpa [#allocation6], 0
    loop: start=0, step=1, limit=4
    $region2: #{tpu_custom_call.1} parent=1 // loop_pre_header
      _
    $region3: #{tpu_custom_call.1} parent=1 // loop_header
      %s21 = sphi 0, %s25
      %p22 = scmp.ge.s32.totalorder %s21, 4
      %s31 = sphi 0, %s33
      %s34 = sphi 0, %s31
      %s35 = sphi 0, %s34
      %s51 = sphi 0, %s35
      %s57 = sphi 0, %s59
      %s60 = sphi 0, %s57
      %s61 = sphi 0, %s60
      %s77 = sphi 0, %s61
      %s81 = sphi 0, %s81
      %s83 = sphi 0, %s81
      %s84 = sphi 0, %s83
      %s98 = sphi 0, %s84
      %s102 = sphi 0, %s102
      %s104 = sphi 0, %s102
      %s105 = sphi 0, %s104
      %s119 = sphi 0, %s105
      %s123 = sphi 0, %s123
      %s125 = sphi 0, %s123
      %s126 = sphi 0, %s125
      %s140 = sphi 0, %s126
      %s144 = sphi 0, %s144
      %s146 = sphi 0, %s144
      %s147 = sphi 0, %s146
      %s161 = sphi 0, %s147
    $region4: #{tpu_custom_call.1} parent=1 // loop_header_branch
      %24 = sbr.rel (%p22) target = $region8
    $region5: #{tpu_custom_call.1} parent=1 // loop_body
      %s26 = ssub.s32 %s21, 1
      %s27 = ssub.s32 %s21, 2
      %s28 = sadd.s32 %s21, 1
      %s29 = ssub.s32 %s21, %s28
      %p30 = scmp.eq.s32.totalorder %s29, 0
      %s32 = sadd.s32 %s31, 1
      %s33 = scalar_select %p30, %s31, %s32
      %p36 = pneg %p30
      %p37 = scmp.eq.s32.totalorder %s21, 1
      %p38 = por %p36, %p37
      %p39 = scmp.ne.s32.totalorder %s31, %s34
      %p40 = scmp.eq.s32.totalorder %s21, 0
      %p41 = por %p39, %p40
      %p42 = scmp.ne.s32.totalorder %s31, %s34
      %p43 = scmp.eq.s32.totalorder %s26, 1
      %p44 = por %p42, %p43
      %p45 = scmp.ne.s32.totalorder %s34, %s35
      %p46 = scmp.eq.s32.totalorder %s26, 0
      %p47 = por %p45, %p46
      %p48 = scmp.ne.s32.totalorder %s34, %s35
      %p49 = scmp.eq.s32.totalorder %s27, 1
      %p50 = por %p48, %p49
      %p52 = scmp.ne.s32.totalorder %s35, %s51
      %p53 = scmp.eq.s32.totalorder %s27, 0
      %p54 = por %p52, %p53
      %s55 = ssub.s32 %s21, %s28
      %p56 = scmp.eq.s32.totalorder %s55, 0
      %s58 = sadd.s32 %s57, 1
      %s59 = scalar_select %p56, %s57, %s58
      %p62 = pneg %p56
      %p63 = scmp.eq.s32.totalorder %s21, 1
      %p64 = por %p62, %p63
      %p65 = scmp.ne.s32.totalorder %s57, %s60
      %p66 = scmp.eq.s32.totalorder %s21, 0
      %p67 = por %p65, %p66
      %p68 = scmp.ne.s32.totalorder %s57, %s60
      %p69 = scmp.eq.s32.totalorder %s26, 1
      %p70 = por %p68, %p69
      %p71 = scmp.ne.s32.totalorder %s60, %s61
      %p72 = scmp.eq.s32.totalorder %s26, 0
      %p73 = por %p71, %p72
      %p74 = scmp.ne.s32.totalorder %s60, %s61
      %p75 = scmp.eq.s32.totalorder %s27, 1
      %p76 = por %p74, %p75
      %p78 = scmp.ne.s32.totalorder %s61, %s77
      %p79 = scmp.eq.s32.totalorder %s27, 0
      %p80 = por %p78, %p79
      %s82 = sadd.s32 %s81, 1
      %p85 = scmp.eq.s32.totalorder %s21, 1
      %p86 = scmp.ne.s32.totalorder %s81, %s83
      %p87 = scmp.eq.s32.totalorder %s21, 0
      %p88 = por %p86, %p87
      %p89 = scmp.ne.s32.totalorder %s81, %s83
      %p90 = scmp.eq.s32.totalorder %s26, 1
      %p91 = por %p89, %p90
      %p92 = scmp.ne.s32.totalorder %s83, %s84
      %p93 = scmp.eq.s32.totalorder %s26, 0
      %p94 = por %p92, %p93
      %p95 = scmp.ne.s32.totalorder %s83, %s84
      %p96 = scmp.eq.s32.totalorder %s27, 1
      %p97 = por %p95, %p96
      %p99 = scmp.ne.s32.totalorder %s84, %s98
      %p100 = scmp.eq.s32.totalorder %s27, 0
      %p101 = por %p99, %p100
      %s103 = sadd.s32 %s102, 1
      %p106 = scmp.eq.s32.totalorder %s21, 1
      %p107 = scmp.ne.s32.totalorder %s102, %s104
      %p108 = scmp.eq.s32.totalorder %s21, 0
      %p109 = por %p107, %p108
      %p110 = scmp.ne.s32.totalorder %s102, %s104
      %p111 = scmp.eq.s32.totalorder %s26, 1
      %p112 = por %p110, %p111
      %p113 = scmp.ne.s32.totalorder %s104, %s105
      %p114 = scmp.eq.s32.totalorder %s26, 0
      %p115 = por %p113, %p114
      %p116 = scmp.ne.s32.totalorder %s104, %s105
      %p117 = scmp.eq.s32.totalorder %s27, 1
      %p118 = por %p116, %p117
      %p120 = scmp.ne.s32.totalorder %s105, %s119
      %p121 = scmp.eq.s32.totalorder %s27, 0
      %p122 = por %p120, %p121
      %s124 = sadd.s32 %s123, 1
      %p127 = scmp.eq.s32.totalorder %s21, 1
      %p128 = scmp.ne.s32.totalorder %s123, %s125
      %p129 = scmp.eq.s32.totalorder %s21, 0
      %p130 = por %p128, %p129
      %p131 = scmp.ne.s32.totalorder %s123, %s125
      %p132 = scmp.eq.s32.totalorder %s26, 1
      %p133 = por %p131, %p132
      %p134 = scmp.ne.s32.totalorder %s125, %s126
      %p135 = scmp.eq.s32.totalorder %s26, 0
      %p136 = por %p134, %p135
      %p137 = scmp.ne.s32.totalorder %s125, %s126
      %p138 = scmp.eq.s32.totalorder %s27, 1
      %p139 = por %p137, %p138
      %p141 = scmp.ne.s32.totalorder %s126, %s140
      %p142 = scmp.eq.s32.totalorder %s27, 0
      %p143 = por %p141, %p142
      %s145 = sadd.s32 %s144, 1
      %p148 = scmp.eq.s32.totalorder %s21, 1
      %p149 = scmp.ne.s32.totalorder %s144, %s146
      %p150 = scmp.eq.s32.totalorder %s21, 0
      %p151 = por %p149, %p150
      %p152 = scmp.ne.s32.totalorder %s144, %s146
      %p153 = scmp.eq.s32.totalorder %s26, 1
      %p154 = por %p152, %p153
      %p155 = scmp.ne.s32.totalorder %s146, %s147
      %p156 = scmp.eq.s32.totalorder %s26, 0
      %p157 = por %p155, %p156
      %p158 = scmp.ne.s32.totalorder %s146, %s147
      %p159 = scmp.eq.s32.totalorder %s27, 1
      %p160 = por %p158, %p159
      %p162 = scmp.ne.s32.totalorder %s147, %s161
      %p163 = scmp.eq.s32.totalorder %s27, 0
      %p164 = por %p162, %p163
      %p165 = scmp.le.s32.totalorder 1, %s21
      %p166 = scmp.lt.s32.totalorder %s21, 3
      %p167 = pnand %p165, %p166
      %p168 = pneg %p167
      // Predicated region
      $region9: #{tpu_custom_call.1} parent=5 // pred_check
        _
      $region10: #{tpu_custom_call.1} parent=5 // pred_check_branch
        %170 = sbr.rel (%p167) target = $region12
      $region11: #{tpu_custom_call.1} parent=5 // pred_region
        %s171 = ssub.s32 %s21, 1
        // Predicated region
        $region13: #{tpu_custom_call.1} parent=11 // pred_check
          %p172 = pneg %p94
        $region14: #{tpu_custom_call.1} parent=11 // pred_check_branch
          %174 = sbr.rel (%p172) target = $region16
        $region15: #{tpu_custom_call.1} parent=11 // pred_region
          %s176 = ssub.s32 64, 64
          %177 = vsyncadd [#allocation8], %s176
          %s179 = sshll.u32 [#allocation9], 4
          %s180 = int_to_ptr.vmem [resolvable:$true] %s179
          %182 = dma.hbm_to_vmem [thread:$0]  %s2, 64, %s180, [#allocation8]
        $region16: #{tpu_custom_call.1} parent=11 // pred_fallthru
          _
        // Predicated region
        $region17: #{tpu_custom_call.1} parent=11 // pred_check
          %p183 = pneg %p115
        $region18: #{tpu_custom_call.1} parent=11 // pred_check_branch
          %185 = sbr.rel (%p183) target = $region20
        $region19: #{tpu_custom_call.1} parent=11 // pred_region
          %s187 = ssub.s32 64, 64
          %188 = vsyncadd [#allocation11], %s187
          %s190 = sshll.u32 [#allocation10], 4
          %s191 = int_to_ptr.vmem [resolvable:$true] %s190
          %193 = dma.hbm_to_vmem [thread:$0]  %s3, 64, %s191, [#allocation11]
        $region20: #{tpu_custom_call.1} parent=11 // pred_fallthru
          _
        // Predicated region
        $region21: #{tpu_custom_call.1} parent=11 // pred_check
          %p194 = pneg %p136
        $region22: #{tpu_custom_call.1} parent=11 // pred_check_branch
          %196 = sbr.rel (%p194) target = $region24
        $region23: #{tpu_custom_call.1} parent=11 // pred_region
          _
        $region24: #{tpu_custom_call.1} parent=11 // pred_fallthru
          _
      $region12: #{tpu_custom_call.1} parent=5 // pred_fallthru
        _
      %p197 = scmp.lt.s32.totalorder %s21, 2
      // Predicated region
      $region25: #{tpu_custom_call.1} parent=5 // pred_check
        %p198 = pneg %p197
      $region26: #{tpu_custom_call.1} parent=5 // pred_check_branch
        %200 = sbr.rel (%p198) target = $region28
      $region27: #{tpu_custom_call.1} parent=5 // pred_region
        // Predicated region
        $region29: #{tpu_custom_call.1} parent=27 // pred_check
          %p201 = pneg %p41
        $region30: #{tpu_custom_call.1} parent=27 // pred_check_branch
          %203 = sbr.rel (%p201) target = $region32
        $region31: #{tpu_custom_call.1} parent=27 // pred_region
          %s204 = sand.u32 %s31, 1
          %s205 = scalar_lea.sflag [#allocation5], %s204
          %s206 = sand.u32 %s31, 1
          %s207 = smul.addr %s206, 72
          %s208 = scalar_lea.vmem [#allocation4], %s207
          %s209 = smul.u32 9, %s21
          %s211 = ssub.s32 1152, 1152
          %212 = vsyncadd %s205, %s211
          %s213 = smul.addr %s209, 64
          %s214 = scalar_lea.hbm %s0, %s213
          %s215 = sshll.u32 %s208, 4
          %s216 = int_to_ptr.vmem [resolvable:$true] %s215
          %221 = dma.hbm_to_vmem [thread:$0]  %s214, 1152, %s216, %s205, 1152, 576, 36
        $region32: #{tpu_custom_call.1} parent=27 // pred_fallthru
          _
        // Predicated region
        $region33: #{tpu_custom_call.1} parent=27 // pred_check
          %p222 = pneg %p67
        $region34: #{tpu_custom_call.1} parent=27 // pred_check_branch
          %224 = sbr.rel (%p222) target = $region36
        $region35: #{tpu_custom_call.1} parent=27 // pred_region
          %s225 = sand.u32 %s21, 1
          %s226 = scalar_lea.sflag [#allocation8], %s225
          %s227 = sand.u32 %s57, 1
          %s228 = smul.addr %s227, 2304
          %s229 = scalar_lea.vmem [#allocation7], %s228
          %s230 = smul.u32 144, %s21
          %s232 = ssub.s32 36864, 36864
          %233 = vsyncadd %s226, %s232
          %s234 = smul.addr %s230, 4
          %s235 = smul.addr %s234, 64
          %s236 = scalar_lea.hbm %s1, %s235
          %s237 = sshll.u32 %s229, 4
          %s238 = int_to_ptr.vmem [resolvable:$true] %s237
          %243 = dma.hbm_to_vmem [thread:$0]  %s236, 36864, %s238, %s226, 256, 256, 16
        $region36: #{tpu_custom_call.1} parent=27 // pred_fallthru
          _
      $region28: #{tpu_custom_call.1} parent=5 // pred_fallthru
        _
      %p244 = scmp.le.s32.totalorder 1, %s21
      %p245 = scmp.lt.s32.totalorder %s21, 3
      %p246 = pnand %p244, %p245
      %p247 = pneg %p246
      // Predicated region
      $region37: #{tpu_custom_call.1} parent=5 // pred_check
        _
      $region38: #{tpu_custom_call.1} parent=5 // pred_check_branch
        %249 = sbr.rel (%p246) target = $region40
      $region39: #{tpu_custom_call.1} parent=5 // pred_region
        %s250 = ssub.s32 %s21, 1
        %s251 = sand.u32 %s34, 1
        %s252 = scalar_lea.sflag [#allocation5], %s251
        %s253 = sand.u32 %s34, 1
        %s254 = smul.addr %s253, 72
        %s255 = scalar_lea.vmem [#allocation4], %s254
        // Predicated region
        $region41: #{tpu_custom_call.1} parent=39 // pred_check
          %p256 = pneg %p47
        $region42: #{tpu_custom_call.1} parent=39 // pred_check_branch
          %258 = sbr.rel (%p256) target = $region44
        $region43: #{tpu_custom_call.1} parent=39 // pred_region
          %259 = dma.done %s252, 1152
        $region44: #{tpu_custom_call.1} parent=39 // pred_fallthru
          _
        %s260 = sand.u32 %s26, 1
        %s261 = scalar_lea.sflag [#allocation8], %s260
        %s262 = sand.u32 %s60, 1
        %s263 = smul.addr %s262, 2304
        %s264 = scalar_lea.vmem [#allocation7], %s263
        // Predicated region
        $region45: #{tpu_custom_call.1} parent=39 // pred_check
          %p265 = pneg %p73
        $region46: #{tpu_custom_call.1} parent=39 // pred_check_branch
          %267 = sbr.rel (%p265) target = $region48
        $region47: #{tpu_custom_call.1} parent=39 // pred_region
          %268 = dma.done %s261, 36864
        $region48: #{tpu_custom_call.1} parent=39 // pred_fallthru
          _
        // Predicated region
        $region49: #{tpu_custom_call.1} parent=39 // pred_check
          %p269 = pneg %p94
        $region50: #{tpu_custom_call.1} parent=39 // pred_check_branch
          %271 = sbr.rel (%p269) target = $region52
        $region51: #{tpu_custom_call.1} parent=39 // pred_region
          %272 = dma.done [#allocation8], 64
        $region52: #{tpu_custom_call.1} parent=39 // pred_fallthru
          _
        // Predicated region
        $region53: #{tpu_custom_call.1} parent=39 // pred_check
          %p273 = pneg %p115
        $region54: #{tpu_custom_call.1} parent=39 // pred_check_branch
          %275 = sbr.rel (%p273) target = $region56
        $region55: #{tpu_custom_call.1} parent=39 // pred_region
          %276 = dma.done [#allocation11], 64
        $region56: #{tpu_custom_call.1} parent=39 // pred_fallthru
          _
        %s277 = sand.u32 %s34, 1
        %s278 = scalar_lea.sflag [#allocation5], %s277
        %s279 = sand.u32 %s34, 1
        %s280 = smul.addr %s279, 72
        %s281 = scalar_lea.vmem [#allocation4], %s280
        %p282 = pneg %p47
        %p283 = pneg %p44
        %s284 = sand.u32 %s26, 1
        %s285 = scalar_lea.sflag [#allocation8], %s284
        %s286 = sand.u32 %s60, 1
        %s287 = smul.addr %s286, 2304
        %s288 = scalar_lea.vmem [#allocation7], %s287
        %p289 = pneg %p73
        %p290 = pneg %p70
        %p291 = pneg %p94
        %p292 = pneg %p91
        %p293 = pneg %p115
        %p294 = pneg %p112
        %p295 = pneg %p136
        %p296 = pneg %p133
        %p297 = pneg %p157
        %p298 = pneg %p154
        %s299 = smul.u32 9, %s26
        %s300 = smul.u32 144, %s26
        %p302 = scmp.eq.s32.totalorder %s26, 0
        // Predicated region
        $region57: #{tpu_custom_call.1} parent=39 // pred_check
          %p303 = pneg %p302
        $region58: #{tpu_custom_call.1} parent=39 // pred_check_branch
          %305 = sbr.rel (%p303) target = $region60
        $region59: #{tpu_custom_call.1} parent=39 // pred_region
          %306 = vst [vmem:[#allocation2] sm:$0xff] 0.0
          %307 = vst [vmem:[#allocation2 + $0x8] sm:$0xff] 0.0
          %308 = vst [vmem:[#allocation2 + $0x10] sm:$0xff] 0.0
          %309 = vst [vmem:[#allocation2 + $0x18] sm:$0xff] 0.0
          %310 = vst [vmem:[#allocation2 + $0x20] sm:$0xff] 0.0
          %311 = vst [vmem:[#allocation2 + $0x28] sm:$0xff] 0.0
          %312 = vst [vmem:[#allocation2 + $0x30] sm:$0xff] 0.0
          %313 = vst [vmem:[#allocation2 + $0x38] sm:$0xff] 0.0
        $region60: #{tpu_custom_call.1} parent=39 // pred_fallthru
          _
        %v314 = vld [vmem:[#allocation2] sm:$0xff]
        %v315 = vld [vmem:[#allocation2 + $0x8] sm:$0xff]
        %v316 = vld [vmem:[#allocation2 + $0x10] sm:$0xff]
        %v317 = vld [vmem:[#allocation2 + $0x18] sm:$0xff]
        %v318 = vld [vmem:[#allocation2 + $0x20] sm:$0xff]
        %v319 = vld [vmem:[#allocation2 + $0x28] sm:$0xff]
        %v320 = vld [vmem:[#allocation2 + $0x30] sm:$0xff]
        %v321 = vld [vmem:[#allocation2 + $0x38] sm:$0xff]
        %v322 = vld [vmem:[%s255] sm:$0xff]
        %v323 = vld [vmem:[%s255 + $0x8] sm:$0xff]
        %v324 = vld [vmem:[%s255 + $0x10] sm:$0xff]
        %v325 = vld [vmem:[%s255 + $0x18] sm:$0xff]
        %v326 = vld [vmem:[%s255 + $0x20] sm:$0xf]
        %v327 = vld [vmem:[%s255 + $0x24] sm:$0xff]
        %v328 = vld [vmem:[%s255 + $0x2c] sm:$0xff]
        %v329 = vld [vmem:[%s255 + $0x34] sm:$0xff]
        %v330 = vld [vmem:[%s255 + $0x3c] sm:$0xff]
        %v331 = vld [vmem:[%s255 + $0x44] sm:$0xf]
        %v332 = vld [vmem:[%s264] sm:$0xff]
        %v333 = vld [vmem:[%s264 + $0x8] sm:$0xff]
        %v334 = vld [vmem:[%s264 + $0x10] sm:$0xff]
        %v335 = vld [vmem:[%s264 + $0x18] sm:$0xff]
        %v336 = vld [vmem:[%s264 + $0x20] sm:$0xff]
        %v337 = vld [vmem:[%s264 + $0x28] sm:$0xff]
        %v338 = vld [vmem:[%s264 + $0x30] sm:$0xff]
        %v339 = vld [vmem:[%s264 + $0x38] sm:$0xff]
        %v340 = vld [vmem:[%s264 + $0x40] sm:$0xff]
        %v341 = vld [vmem:[%s264 + $0x48] sm:$0xff]
        %v342 = vld [vmem:[%s264 + $0x50] sm:$0xff]
        %v343 = vld [vmem:[%s264 + $0x58] sm:$0xff]
        %v344 = vld [vmem:[%s264 + $0x60] sm:$0xff]
        %v345 = vld [vmem:[%s264 + $0x68] sm:$0xff]
        %v346 = vld [vmem:[%s264 + $0x70] sm:$0xff]
        %v347 = vld [vmem:[%s264 + $0x78] sm:$0xff]
        %v348 = vld [vmem:[%s264 + $0x80] sm:$0xff]
        %v349 = vld [vmem:[%s264 + $0x88] sm:$0xff]
        %v350 = vld [vmem:[%s264 + $0x90] sm:$0xff]
        %v351 = vld [vmem:[%s264 + $0x98] sm:$0xff]
        %v352 = vld [vmem:[%s264 + $0xa0] sm:$0xff]
        %v353 = vld [vmem:[%s264 + $0xa8] sm:$0xff]
        %v354 = vld [vmem:[%s264 + $0xb0] sm:$0xff]
        %v355 = vld [vmem:[%s264 + $0xb8] sm:$0xff]
        %v356 = vld [vmem:[%s264 + $0xc0] sm:$0xff]
        %v357 = vld [vmem:[%s264 + $0xc8] sm:$0xff]
        %v358 = vld [vmem:[%s264 + $0xd0] sm:$0xff]
        %v359 = vld [vmem:[%s264 + $0xd8] sm:$0xff]
        %v360 = vld [vmem:[%s264 + $0xe0] sm:$0xff]
        %v361 = vld [vmem:[%s264 + $0xe8] sm:$0xff]
        %v362 = vld [vmem:[%s264 + $0xf0] sm:$0xff]
        %v363 = vld [vmem:[%s264 + $0xf8] sm:$0xff]
        %v364 = vld [vmem:[%s264 + $0x100] sm:$0xff]
        %v365 = vld [vmem:[%s264 + $0x108] sm:$0xff]
        %v366 = vld [vmem:[%s264 + $0x110] sm:$0xff]
        %v367 = vld [vmem:[%s264 + $0x118] sm:$0xff]
        %v368 = vld [vmem:[%s264 + $0x120] sm:$0xff]
        %v369 = vld [vmem:[%s264 + $0x128] sm:$0xff]
        %v370 = vld [vmem:[%s264 + $0x130] sm:$0xff]
        %v371 = vld [vmem:[%s264 + $0x138] sm:$0xff]
        %v372 = vld [vmem:[%s264 + $0x140] sm:$0xff]
        %v373 = vld [vmem:[%s264 + $0x148] sm:$0xff]
        %v374 = vld [vmem:[%s264 + $0x150] sm:$0xff]
        %v375 = vld [vmem:[%s264 + $0x158] sm:$0xff]
        %v376 = vld [vmem:[%s264 + $0x160] sm:$0xff]
        %v377 = vld [vmem:[%s264 + $0x168] sm:$0xff]
        %v378 = vld [vmem:[%s264 + $0x170] sm:$0xff]
        %v379 = vld [vmem:[%s264 + $0x178] sm:$0xff]
        %v380 = vld [vmem:[%s264 + $0x180] sm:$0xff]
        %v381 = vld [vmem:[%s264 + $0x188] sm:$0xff]
        %v382 = vld [vmem:[%s264 + $0x190] sm:$0xff]
        %v383 = vld [vmem:[%s264 + $0x198] sm:$0xff]
        %v384 = vld [vmem:[%s264 + $0x1a0] sm:$0xff]
        %v385 = vld [vmem:[%s264 + $0x1a8] sm:$0xff]
        %v386 = vld [vmem:[%s264 + $0x1b0] sm:$0xff]
        %v387 = vld [vmem:[%s264 + $0x1b8] sm:$0xff]
        %v388 = vld [vmem:[%s264 + $0x1c0] sm:$0xff]
        %v389 = vld [vmem:[%s264 + $0x1c8] sm:$0xff]
        %v390 = vld [vmem:[%s264 + $0x1d0] sm:$0xff]
        %v391 = vld [vmem:[%s264 + $0x1d8] sm:$0xff]
        %v392 = vld [vmem:[%s264 + $0x1e0] sm:$0xff]
        %v393 = vld [vmem:[%s264 + $0x1e8] sm:$0xff]
        %v394 = vld [vmem:[%s264 + $0x1f0] sm:$0xff]
        %v395 = vld [vmem:[%s264 + $0x1f8] sm:$0xff]
        %v396 = vld [vmem:[%s264 + $0x200] sm:$0xff]
        %v397 = vld [vmem:[%s264 + $0x208] sm:$0xff]
        %v398 = vld [vmem:[%s264 + $0x210] sm:$0xff]
        %v399 = vld [vmem:[%s264 + $0x218] sm:$0xff]
        %v400 = vld [vmem:[%s264 + $0x220] sm:$0xff]
        %v401 = vld [vmem:[%s264 + $0x228] sm:$0xff]
        %v402 = vld [vmem:[%s264 + $0x230] sm:$0xff]
        %v403 = vld [vmem:[%s264 + $0x238] sm:$0xff]
        %v404 = vld [vmem:[%s264 + $0x240] sm:$0xff]
        %v405 = vld [vmem:[%s264 + $0x248] sm:$0xff]
        %v406 = vld [vmem:[%s264 + $0x250] sm:$0xff]
        %v407 = vld [vmem:[%s264 + $0x258] sm:$0xff]
        %v408 = vld [vmem:[%s264 + $0x260] sm:$0xff]
        %v409 = vld [vmem:[%s264 + $0x268] sm:$0xff]
        %v410 = vld [vmem:[%s264 + $0x270] sm:$0xff]
        %v411 = vld [vmem:[%s264 + $0x278] sm:$0xff]
        %v412 = vld [vmem:[%s264 + $0x280] sm:$0xff]
        %v413 = vld [vmem:[%s264 + $0x288] sm:$0xff]
        %v414 = vld [vmem:[%s264 + $0x290] sm:$0xff]
        %v415 = vld [vmem:[%s264 + $0x298] sm:$0xff]
        %v416 = vld [vmem:[%s264 + $0x2a0] sm:$0xff]
        %v417 = vld [vmem:[%s264 + $0x2a8] sm:$0xff]
        %v418 = vld [vmem:[%s264 + $0x2b0] sm:$0xff]
        %v419 = vld [vmem:[%s264 + $0x2b8] sm:$0xff]
        %v420 = vld [vmem:[%s264 + $0x2c0] sm:$0xff]
        %v421 = vld [vmem:[%s264 + $0x2c8] sm:$0xff]
        %v422 = vld [vmem:[%s264 + $0x2d0] sm:$0xff]
        %v423 = vld [vmem:[%s264 + $0x2d8] sm:$0xff]
        %v424 = vld [vmem:[%s264 + $0x2e0] sm:$0xff]
        %v425 = vld [vmem:[%s264 + $0x2e8] sm:$0xff]
        %v426 = vld [vmem:[%s264 + $0x2f0] sm:$0xff]
        %v427 = vld [vmem:[%s264 + $0x2f8] sm:$0xff]
        %v428 = vld [vmem:[%s264 + $0x300] sm:$0xff]
        %v429 = vld [vmem:[%s264 + $0x308] sm:$0xff]
        %v430 = vld [vmem:[%s264 + $0x310] sm:$0xff]
        %v431 = vld [vmem:[%s264 + $0x318] sm:$0xff]
        %v432 = vld [vmem:[%s264 + $0x320] sm:$0xff]
        %v433 = vld [vmem:[%s264 + $0x328] sm:$0xff]
        %v434 = vld [vmem:[%s264 + $0x330] sm:$0xff]
        %v435 = vld [vmem:[%s264 + $0x338] sm:$0xff]
        %v436 = vld [vmem:[%s264 + $0x340] sm:$0xff]
        %v437 = vld [vmem:[%s264 + $0x348] sm:$0xff]
        %v438 = vld [vmem:[%s264 + $0x350] sm:$0xff]
        %v439 = vld [vmem:[%s264 + $0x358] sm:$0xff]
        %v440 = vld [vmem:[%s264 + $0x360] sm:$0xff]
        %v441 = vld [vmem:[%s264 + $0x368] sm:$0xff]
        %v442 = vld [vmem:[%s264 + $0x370] sm:$0xff]
        %v443 = vld [vmem:[%s264 + $0x378] sm:$0xff]
        %v444 = vld [vmem:[%s264 + $0x380] sm:$0xff]
        %v445 = vld [vmem:[%s264 + $0x388] sm:$0xff]
        %v446 = vld [vmem:[%s264 + $0x390] sm:$0xff]
        %v447 = vld [vmem:[%s264 + $0x398] sm:$0xff]
        %v448 = vld [vmem:[%s264 + $0x3a0] sm:$0xff]
        %v449 = vld [vmem:[%s264 + $0x3a8] sm:$0xff]
        %v450 = vld [vmem:[%s264 + $0x3b0] sm:$0xff]
        %v451 = vld [vmem:[%s264 + $0x3b8] sm:$0xff]
        %v452 = vld [vmem:[%s264 + $0x3c0] sm:$0xff]
        %v453 = vld [vmem:[%s264 + $0x3c8] sm:$0xff]
        %v454 = vld [vmem:[%s264 + $0x3d0] sm:$0xff]
        %v455 = vld [vmem:[%s264 + $0x3d8] sm:$0xff]
        %v456 = vld [vmem:[%s264 + $0x3e0] sm:$0xff]
        %v457 = vld [vmem:[%s264 + $0x3e8] sm:$0xff]
        %v458 = vld [vmem:[%s264 + $0x3f0] sm:$0xff]
        %v459 = vld [vmem:[%s264 + $0x3f8] sm:$0xff]
        %v460 = vld [vmem:[%s264 + $0x400] sm:$0xff]
        %v461 = vld [vmem:[%s264 + $0x408] sm:$0xff]
        %v462 = vld [vmem:[%s264 + $0x410] sm:$0xff]
        %v463 = vld [vmem:[%s264 + $0x418] sm:$0xff]
        %v464 = vld [vmem:[%s264 + $0x420] sm:$0xff]
        %v465 = vld [vmem:[%s264 + $0x428] sm:$0xff]
        %v466 = vld [vmem:[%s264 + $0x430] sm:$0xff]
        %v467 = vld [vmem:[%s264 + $0x438] sm:$0xff]
        %v468 = vld [vmem:[%s264 + $0x440] sm:$0xff]
        %v469 = vld [vmem:[%s264 + $0x448] sm:$0xff]
        %v470 = vld [vmem:[%s264 + $0x450] sm:$0xff]
        %v471 = vld [vmem:[%s264 + $0x458] sm:$0xff]
        %v472 = vld [vmem:[%s264 + $0x460] sm:$0xff]
        %v473 = vld [vmem:[%s264 + $0x468] sm:$0xff]
        %v474 = vld [vmem:[%s264 + $0x470] sm:$0xff]
        %v475 = vld [vmem:[%s264 + $0x478] sm:$0xff]
        %v476 = vld [vmem:[%s264 + $0x480] sm:$0xff]
        %v477 = vld [vmem:[%s264 + $0x488] sm:$0xff]
        %v478 = vld [vmem:[%s264 + $0x490] sm:$0xff]
        %v479 = vld [vmem:[%s264 + $0x498] sm:$0xff]
        %v480 = vld [vmem:[%s264 + $0x4a0] sm:$0xff]
        %v481 = vld [vmem:[%s264 + $0x4a8] sm:$0xff]
        %v482 = vld [vmem:[%s264 + $0x4b0] sm:$0xff]
        %v483 = vld [vmem:[%s264 + $0x4b8] sm:$0xff]
        %v484 = vld [vmem:[%s264 + $0x4c0] sm:$0xff]
        %v485 = vld [vmem:[%s264 + $0x4c8] sm:$0xff]
        %v486 = vld [vmem:[%s264 + $0x4d0] sm:$0xff]
        %v487 = vld [vmem:[%s264 + $0x4d8] sm:$0xff]
        %v488 = vld [vmem:[%s264 + $0x4e0] sm:$0xff]
        %v489 = vld [vmem:[%s264 + $0x4e8] sm:$0xff]
        %v490 = vld [vmem:[%s264 + $0x4f0] sm:$0xff]
        %v491 = vld [vmem:[%s264 + $0x4f8] sm:$0xff]
        %v492 = vld [vmem:[%s264 + $0x500] sm:$0xff]
        %v493 = vld [vmem:[%s264 + $0x508] sm:$0xff]
        %v494 = vld [vmem:[%s264 + $0x510] sm:$0xff]
        %v495 = vld [vmem:[%s264 + $0x518] sm:$0xff]
        %v496 = vld [vmem:[%s264 + $0x520] sm:$0xff]
        %v497 = vld [vmem:[%s264 + $0x528] sm:$0xff]
        %v498 = vld [vmem:[%s264 + $0x530] sm:$0xff]
        %v499 = vld [vmem:[%s264 + $0x538] sm:$0xff]
        %v500 = vld [vmem:[%s264 + $0x540] sm:$0xff]
        %v501 = vld [vmem:[%s264 + $0x548] sm:$0xff]
        %v502 = vld [vmem:[%s264 + $0x550] sm:$0xff]
        %v503 = vld [vmem:[%s264 + $0x558] sm:$0xff]
        %v504 = vld [vmem:[%s264 + $0x560] sm:$0xff]
        %v505 = vld [vmem:[%s264 + $0x568] sm:$0xff]
        %v506 = vld [vmem:[%s264 + $0x570] sm:$0xff]
        %v507 = vld [vmem:[%s264 + $0x578] sm:$0xff]
        %v508 = vld [vmem:[%s264 + $0x580] sm:$0xff]
        %v509 = vld [vmem:[%s264 + $0x588] sm:$0xff]
        %v510 = vld [vmem:[%s264 + $0x590] sm:$0xff]
        %v511 = vld [vmem:[%s264 + $0x598] sm:$0xff]
        %v512 = vld [vmem:[%s264 + $0x5a0] sm:$0xff]
        %v513 = vld [vmem:[%s264 + $0x5a8] sm:$0xff]
        %v514 = vld [vmem:[%s264 + $0x5b0] sm:$0xff]
        %v515 = vld [vmem:[%s264 + $0x5b8] sm:$0xff]
        %v516 = vld [vmem:[%s264 + $0x5c0] sm:$0xff]
        %v517 = vld [vmem:[%s264 + $0x5c8] sm:$0xff]
        %v518 = vld [vmem:[%s264 + $0x5d0] sm:$0xff]
        %v519 = vld [vmem:[%s264 + $0x5d8] sm:$0xff]
        %v520 = vld [vmem:[%s264 + $0x5e0] sm:$0xff]
        %v521 = vld [vmem:[%s264 + $0x5e8] sm:$0xff]
        %v522 = vld [vmem:[%s264 + $0x5f0] sm:$0xff]
        %v523 = vld [vmem:[%s264 + $0x5f8] sm:$0xff]
        %v524 = vld [vmem:[%s264 + $0x600] sm:$0xff]
        %v525 = vld [vmem:[%s264 + $0x608] sm:$0xff]
        %v526 = vld [vmem:[%s264 + $0x610] sm:$0xff]
        %v527 = vld [vmem:[%s264 + $0x618] sm:$0xff]
        %v528 = vld [vmem:[%s264 + $0x620] sm:$0xff]
        %v529 = vld [vmem:[%s264 + $0x628] sm:$0xff]
        %v530 = vld [vmem:[%s264 + $0x630] sm:$0xff]
        %v531 = vld [vmem:[%s264 + $0x638] sm:$0xff]
        %v532 = vld [vmem:[%s264 + $0x640] sm:$0xff]
        %v533 = vld [vmem:[%s264 + $0x648] sm:$0xff]
        %v534 = vld [vmem:[%s264 + $0x650] sm:$0xff]
        %v535 = vld [vmem:[%s264 + $0x658] sm:$0xff]
        %v536 = vld [vmem:[%s264 + $0x660] sm:$0xff]
        %v537 = vld [vmem:[%s264 + $0x668] sm:$0xff]
        %v538 = vld [vmem:[%s264 + $0x670] sm:$0xff]
        %v539 = vld [vmem:[%s264 + $0x678] sm:$0xff]
        %v540 = vld [vmem:[%s264 + $0x680] sm:$0xff]
        %v541 = vld [vmem:[%s264 + $0x688] sm:$0xff]
        %v542 = vld [vmem:[%s264 + $0x690] sm:$0xff]
        %v543 = vld [vmem:[%s264 + $0x698] sm:$0xff]
        %v544 = vld [vmem:[%s264 + $0x6a0] sm:$0xff]
        %v545 = vld [vmem:[%s264 + $0x6a8] sm:$0xff]
        %v546 = vld [vmem:[%s264 + $0x6b0] sm:$0xff]
        %v547 = vld [vmem:[%s264 + $0x6b8] sm:$0xff]
        %v548 = vld [vmem:[%s264 + $0x6c0] sm:$0xff]
        %v549 = vld [vmem:[%s264 + $0x6c8] sm:$0xff]
        %v550 = vld [vmem:[%s264 + $0x6d0] sm:$0xff]
        %v551 = vld [vmem:[%s264 + $0x6d8] sm:$0xff]
        %v552 = vld [vmem:[%s264 + $0x6e0] sm:$0xff]
        %v553 = vld [vmem:[%s264 + $0x6e8] sm:$0xff]
        %v554 = vld [vmem:[%s264 + $0x6f0] sm:$0xff]
        %v555 = vld [vmem:[%s264 + $0x6f8] sm:$0xff]
        %v556 = vld [vmem:[%s264 + $0x700] sm:$0xff]
        %v557 = vld [vmem:[%s264 + $0x708] sm:$0xff]
        %v558 = vld [vmem:[%s264 + $0x710] sm:$0xff]
        %v559 = vld [vmem:[%s264 + $0x718] sm:$0xff]
        %v560 = vld [vmem:[%s264 + $0x720] sm:$0xff]
        %v561 = vld [vmem:[%s264 + $0x728] sm:$0xff]
        %v562 = vld [vmem:[%s264 + $0x730] sm:$0xff]
        %v563 = vld [vmem:[%s264 + $0x738] sm:$0xff]
        %v564 = vld [vmem:[%s264 + $0x740] sm:$0xff]
        %v565 = vld [vmem:[%s264 + $0x748] sm:$0xff]
        %v566 = vld [vmem:[%s264 + $0x750] sm:$0xff]
        %v567 = vld [vmem:[%s264 + $0x758] sm:$0xff]
        %v568 = vld [vmem:[%s264 + $0x760] sm:$0xff]
        %v569 = vld [vmem:[%s264 + $0x768] sm:$0xff]
        %v570 = vld [vmem:[%s264 + $0x770] sm:$0xff]
        %v571 = vld [vmem:[%s264 + $0x778] sm:$0xff]
        %v572 = vld [vmem:[%s264 + $0x780] sm:$0xff]
        %v573 = vld [vmem:[%s264 + $0x788] sm:$0xff]
        %v574 = vld [vmem:[%s264 + $0x790] sm:$0xff]
        %v575 = vld [vmem:[%s264 + $0x798] sm:$0xff]
        %v576 = vld [vmem:[%s264 + $0x7a0] sm:$0xff]
        %v577 = vld [vmem:[%s264 + $0x7a8] sm:$0xff]
        %v578 = vld [vmem:[%s264 + $0x7b0] sm:$0xff]
        %v579 = vld [vmem:[%s264 + $0x7b8] sm:$0xff]
        %v580 = vld [vmem:[%s264 + $0x7c0] sm:$0xff]
        %v581 = vld [vmem:[%s264 + $0x7c8] sm:$0xff]
        %v582 = vld [vmem:[%s264 + $0x7d0] sm:$0xff]
        %v583 = vld [vmem:[%s264 + $0x7d8] sm:$0xff]
        %v584 = vld [vmem:[%s264 + $0x7e0] sm:$0xff]
        %v585 = vld [vmem:[%s264 + $0x7e8] sm:$0xff]
        %v586 = vld [vmem:[%s264 + $0x7f0] sm:$0xff]
        %v587 = vld [vmem:[%s264 + $0x7f8] sm:$0xff]
        %v588 = vld [vmem:[%s264 + $0x800] sm:$0xff]
        %v589 = vld [vmem:[%s264 + $0x808] sm:$0xff]
        %v590 = vld [vmem:[%s264 + $0x810] sm:$0xff]
        %v591 = vld [vmem:[%s264 + $0x818] sm:$0xff]
        %v592 = vld [vmem:[%s264 + $0x820] sm:$0xff]
        %v593 = vld [vmem:[%s264 + $0x828] sm:$0xff]
        %v594 = vld [vmem:[%s264 + $0x830] sm:$0xff]
        %v595 = vld [vmem:[%s264 + $0x838] sm:$0xff]
        %v596 = vld [vmem:[%s264 + $0x840] sm:$0xff]
        %v597 = vld [vmem:[%s264 + $0x848] sm:$0xff]
        %v598 = vld [vmem:[%s264 + $0x850] sm:$0xff]
        %v599 = vld [vmem:[%s264 + $0x858] sm:$0xff]
        %v600 = vld [vmem:[%s264 + $0x860] sm:$0xff]
        %v601 = vld [vmem:[%s264 + $0x868] sm:$0xff]
        %v602 = vld [vmem:[%s264 + $0x870] sm:$0xff]
        %v603 = vld [vmem:[%s264 + $0x878] sm:$0xff]
        %v604 = vld [vmem:[%s264 + $0x880] sm:$0xff]
        %v605 = vld [vmem:[%s264 + $0x888] sm:$0xff]
        %v606 = vld [vmem:[%s264 + $0x890] sm:$0xff]
        %v607 = vld [vmem:[%s264 + $0x898] sm:$0xff]
        %v608 = vld [vmem:[%s264 + $0x8a0] sm:$0xff]
        %v609 = vld [vmem:[%s264 + $0x8a8] sm:$0xff]
        %v610 = vld [vmem:[%s264 + $0x8b0] sm:$0xff]
        %v611 = vld [vmem:[%s264 + $0x8b8] sm:$0xff]
        %v612 = vld [vmem:[%s264 + $0x8c0] sm:$0xff]
        %v613 = vld [vmem:[%s264 + $0x8c8] sm:$0xff]
        %v614 = vld [vmem:[%s264 + $0x8d0] sm:$0xff]
        %v615 = vld [vmem:[%s264 + $0x8d8] sm:$0xff]
        %v616 = vld [vmem:[%s264 + $0x8e0] sm:$0xff]
        %v617 = vld [vmem:[%s264 + $0x8e8] sm:$0xff]
        %v618 = vld [vmem:[%s264 + $0x8f0] sm:$0xff]
        %v619 = vld [vmem:[%s264 + $0x8f8] sm:$0xff]
        %v630 = vunpack.c.l.b16 %v322
        %v631 = vunpack.c.h.b16 %v322
        %v632 = vunpack.c.l.b16 %v323
        %v633 = vunpack.c.h.b16 %v323
        %v634 = vunpack.c.l.b16 %v324
        %v635 = vunpack.c.h.b16 %v324
        %v636 = vunpack.c.l.b16 %v325
        %v637 = vunpack.c.h.b16 %v325
        %v638 = vunpack.c.l.b16 %v326
        %v639 = vunpack.c.l.b16 %v327
        %v640 = vunpack.c.h.b16 %v327
        %v641 = vunpack.c.l.b16 %v328
        %v642 = vunpack.c.h.b16 %v328
        %v643 = vunpack.c.l.b16 %v329
        %v644 = vunpack.c.h.b16 %v329
        %v645 = vunpack.c.l.b16 %v330
        %v646 = vunpack.c.h.b16 %v330
        %v647 = vunpack.c.l.b16 %v331
        %v648 = vpack.c.b16 %v639, %v630
        %v649 = vpack.c.b16 %v640, %v631
        %v650 = vpack.c.b16 %v641, %v632
        %v651 = vpack.c.b16 %v642, %v633
        %v652 = vpack.c.b16 %v643, %v634
        %v653 = vpack.c.b16 %v644, %v635
        %v654 = vpack.c.b16 %v645, %v636
        %v655 = vpack.c.b16 %v646, %v637
        %v656 = vpack.c.b16 %v647, %v638
        %v954 = vunpack.c.l.b16 %v332
        %v955 = vunpack.c.h.b16 %v332
        %v956 = vunpack.c.l.b16 %v333
        %v957 = vunpack.c.h.b16 %v333
        %v958 = vunpack.c.l.b16 %v334
        %v959 = vunpack.c.h.b16 %v334
        %v960 = vunpack.c.l.b16 %v335
        %v961 = vunpack.c.h.b16 %v335
        %v962 = vunpack.c.l.b16 %v336
        %v963 = vunpack.c.h.b16 %v336
        %v964 = vunpack.c.l.b16 %v337
        %v965 = vunpack.c.h.b16 %v337
        %v966 = vunpack.c.l.b16 %v338
        %v967 = vunpack.c.h.b16 %v338
        %v968 = vunpack.c.l.b16 %v339
        %v969 = vunpack.c.h.b16 %v339
        %v970 = vunpack.c.l.b16 %v340
        %v971 = vunpack.c.h.b16 %v340
        %v972 = vunpack.c.l.b16 %v341
        %v973 = vunpack.c.h.b16 %v341
        %v974 = vunpack.c.l.b16 %v342
        %v975 = vunpack.c.h.b16 %v342
        %v976 = vunpack.c.l.b16 %v343
        %v977 = vunpack.c.h.b16 %v343
        %v978 = vunpack.c.l.b16 %v344
        %v979 = vunpack.c.h.b16 %v344
        %v980 = vunpack.c.l.b16 %v345
        %v981 = vunpack.c.h.b16 %v345
        %v982 = vunpack.c.l.b16 %v346
        %v983 = vunpack.c.h.b16 %v346
        %v984 = vunpack.c.l.b16 %v347
        %v985 = vunpack.c.h.b16 %v347
        %v986 = vunpack.c.l.b16 %v348
        %v987 = vunpack.c.h.b16 %v348
        %v988 = vunpack.c.l.b16 %v349
        %v989 = vunpack.c.h.b16 %v349
        %v990 = vunpack.c.l.b16 %v350
        %v991 = vunpack.c.h.b16 %v350
        %v992 = vunpack.c.l.b16 %v351
        %v993 = vunpack.c.h.b16 %v351
        %v994 = vunpack.c.l.b16 %v352
        %v995 = vunpack.c.h.b16 %v352
        %v996 = vunpack.c.l.b16 %v353
        %v997 = vunpack.c.h.b16 %v353
        %v998 = vunpack.c.l.b16 %v354
        %v999 = vunpack.c.h.b16 %v354
        %v1000 = vunpack.c.l.b16 %v355
        %v1001 = vunpack.c.h.b16 %v355
        %v1002 = vunpack.c.l.b16 %v356
        %v1003 = vunpack.c.h.b16 %v356
        %v1004 = vunpack.c.l.b16 %v357
        %v1005 = vunpack.c.h.b16 %v357
        %v1006 = vunpack.c.l.b16 %v358
        %v1007 = vunpack.c.h.b16 %v358
        %v1008 = vunpack.c.l.b16 %v359
        %v1009 = vunpack.c.h.b16 %v359
        %v1010 = vunpack.c.l.b16 %v360
        %v1011 = vunpack.c.h.b16 %v360
        %v1012 = vunpack.c.l.b16 %v361
        %v1013 = vunpack.c.h.b16 %v361
        %v1014 = vunpack.c.l.b16 %v362
        %v1015 = vunpack.c.h.b16 %v362
        %v1016 = vunpack.c.l.b16 %v363
        %v1017 = vunpack.c.h.b16 %v363
        %v1018 = vunpack.c.l.b16 %v364
        %v1019 = vunpack.c.h.b16 %v364
        %v1020 = vunpack.c.l.b16 %v365
        %v1021 = vunpack.c.h.b16 %v365
        %v1022 = vunpack.c.l.b16 %v366
        %v1023 = vunpack.c.h.b16 %v366
        %v1024 = vunpack.c.l.b16 %v367
        %v1025 = vunpack.c.h.b16 %v367
        %v1026 = vunpack.c.l.b16 %v368
        %v1027 = vunpack.c.h.b16 %v368
        %v1028 = vunpack.c.l.b16 %v369
        %v1029 = vunpack.c.h.b16 %v369
        %v1030 = vunpack.c.l.b16 %v370
        %v1031 = vunpack.c.h.b16 %v370
        %v1032 = vunpack.c.l.b16 %v371
        %v1033 = vunpack.c.h.b16 %v371
        %v1034 = vunpack.c.l.b16 %v372
        %v1035 = vunpack.c.h.b16 %v372
        %v1036 = vunpack.c.l.b16 %v373
        %v1037 = vunpack.c.h.b16 %v373
        %v1038 = vunpack.c.l.b16 %v374
        %v1039 = vunpack.c.h.b16 %v374
        %v1040 = vunpack.c.l.b16 %v375
        %v1041 = vunpack.c.h.b16 %v375
        %v1042 = vunpack.c.l.b16 %v376
        %v1043 = vunpack.c.h.b16 %v376
        %v1044 = vunpack.c.l.b16 %v377
        %v1045 = vunpack.c.h.b16 %v377
        %v1046 = vunpack.c.l.b16 %v378
        %v1047 = vunpack.c.h.b16 %v378
        %v1048 = vunpack.c.l.b16 %v379
        %v1049 = vunpack.c.h.b16 %v379
        %v1050 = vunpack.c.l.b16 %v380
        %v1051 = vunpack.c.h.b16 %v380
        %v1052 = vunpack.c.l.b16 %v381
        %v1053 = vunpack.c.h.b16 %v381
        %v1054 = vunpack.c.l.b16 %v382
        %v1055 = vunpack.c.h.b16 %v382
        %v1056 = vunpack.c.l.b16 %v383
        %v1057 = vunpack.c.h.b16 %v383
        %v1058 = vunpack.c.l.b16 %v384
        %v1059 = vunpack.c.h.b16 %v384
        %v1060 = vunpack.c.l.b16 %v385
        %v1061 = vunpack.c.h.b16 %v385
        %v1062 = vunpack.c.l.b16 %v386
        %v1063 = vunpack.c.h.b16 %v386
        %v1064 = vunpack.c.l.b16 %v387
        %v1065 = vunpack.c.h.b16 %v387
        %v1066 = vunpack.c.l.b16 %v388
        %v1067 = vunpack.c.h.b16 %v388
        %v1068 = vunpack.c.l.b16 %v389
        %v1069 = vunpack.c.h.b16 %v389
        %v1070 = vunpack.c.l.b16 %v390
        %v1071 = vunpack.c.h.b16 %v390
        %v1072 = vunpack.c.l.b16 %v391
        %v1073 = vunpack.c.h.b16 %v391
        %v1074 = vunpack.c.l.b16 %v392
        %v1075 = vunpack.c.h.b16 %v392
        %v1076 = vunpack.c.l.b16 %v393
        %v1077 = vunpack.c.h.b16 %v393
        %v1078 = vunpack.c.l.b16 %v394
        %v1079 = vunpack.c.h.b16 %v394
        %v1080 = vunpack.c.l.b16 %v395
        %v1081 = vunpack.c.h.b16 %v395
        %v1082 = vunpack.c.l.b16 %v396
        %v1083 = vunpack.c.h.b16 %v396
        %v1084 = vunpack.c.l.b16 %v397
        %v1085 = vunpack.c.h.b16 %v397
        %v1086 = vunpack.c.l.b16 %v398
        %v1087 = vunpack.c.h.b16 %v398
        %v1088 = vunpack.c.l.b16 %v399
        %v1089 = vunpack.c.h.b16 %v399
        %v1090 = vunpack.c.l.b16 %v400
        %v1091 = vunpack.c.h.b16 %v400
        %v1092 = vunpack.c.l.b16 %v401
        %v1093 = vunpack.c.h.b16 %v401
        %v1094 = vunpack.c.l.b16 %v402
        %v1095 = vunpack.c.h.b16 %v402
        %v1096 = vunpack.c.l.b16 %v403
        %v1097 = vunpack.c.h.b16 %v403
        %v1098 = vunpack.c.l.b16 %v404
        %v1099 = vunpack.c.h.b16 %v404
        %v1100 = vunpack.c.l.b16 %v405
        %v1101 = vunpack.c.h.b16 %v405
        %v1102 = vunpack.c.l.b16 %v406
        %v1103 = vunpack.c.h.b16 %v406
        %v1104 = vunpack.c.l.b16 %v407
        %v1105 = vunpack.c.h.b16 %v407
        %v1106 = vunpack.c.l.b16 %v408
        %v1107 = vunpack.c.h.b16 %v408
        %v1108 = vunpack.c.l.b16 %v409
        %v1109 = vunpack.c.h.b16 %v409
        %v1110 = vunpack.c.l.b16 %v410
        %v1111 = vunpack.c.h.b16 %v410
        %v1112 = vunpack.c.l.b16 %v411
        %v1113 = vunpack.c.h.b16 %v411
        %v1114 = vunpack.c.l.b16 %v412
        %v1115 = vunpack.c.h.b16 %v412
        %v1116 = vunpack.c.l.b16 %v413
        %v1117 = vunpack.c.h.b16 %v413
        %v1118 = vunpack.c.l.b16 %v414
        %v1119 = vunpack.c.h.b16 %v414
        %v1120 = vunpack.c.l.b16 %v415
        %v1121 = vunpack.c.h.b16 %v415
        %v1122 = vunpack.c.l.b16 %v416
        %v1123 = vunpack.c.h.b16 %v416
        %v1124 = vunpack.c.l.b16 %v417
        %v1125 = vunpack.c.h.b16 %v417
        %v1126 = vunpack.c.l.b16 %v418
        %v1127 = vunpack.c.h.b16 %v418
        %v1128 = vunpack.c.l.b16 %v419
        %v1129 = vunpack.c.h.b16 %v419
        %v1130 = vunpack.c.l.b16 %v420
        %v1131 = vunpack.c.h.b16 %v420
        %v1132 = vunpack.c.l.b16 %v421
        %v1133 = vunpack.c.h.b16 %v421
        %v1134 = vunpack.c.l.b16 %v422
        %v1135 = vunpack.c.h.b16 %v422
        %v1136 = vunpack.c.l.b16 %v423
        %v1137 = vunpack.c.h.b16 %v423
        %v1138 = vunpack.c.l.b16 %v424
        %v1139 = vunpack.c.h.b16 %v424
        %v1140 = vunpack.c.l.b16 %v425
        %v1141 = vunpack.c.h.b16 %v425
        %v1142 = vunpack.c.l.b16 %v426
        %v1143 = vunpack.c.h.b16 %v426
        %v1144 = vunpack.c.l.b16 %v427
        %v1145 = vunpack.c.h.b16 %v427
        %v1146 = vunpack.c.l.b16 %v428
        %v1147 = vunpack.c.h.b16 %v428
        %v1148 = vunpack.c.l.b16 %v429
        %v1149 = vunpack.c.h.b16 %v429
        %v1150 = vunpack.c.l.b16 %v430
        %v1151 = vunpack.c.h.b16 %v430
        %v1152 = vunpack.c.l.b16 %v431
        %v1153 = vunpack.c.h.b16 %v431
        %v1154 = vunpack.c.l.b16 %v432
        %v1155 = vunpack.c.h.b16 %v432
        %v1156 = vunpack.c.l.b16 %v433
        %v1157 = vunpack.c.h.b16 %v433
        %v1158 = vunpack.c.l.b16 %v434
        %v1159 = vunpack.c.h.b16 %v434
        %v1160 = vunpack.c.l.b16 %v435
        %v1161 = vunpack.c.h.b16 %v435
        %v1162 = vunpack.c.l.b16 %v436
        %v1163 = vunpack.c.h.b16 %v436
        %v1164 = vunpack.c.l.b16 %v437
        %v1165 = vunpack.c.h.b16 %v437
        %v1166 = vunpack.c.l.b16 %v438
        %v1167 = vunpack.c.h.b16 %v438
        %v1168 = vunpack.c.l.b16 %v439
        %v1169 = vunpack.c.h.b16 %v439
        %v1170 = vunpack.c.l.b16 %v440
        %v1171 = vunpack.c.h.b16 %v440
        %v1172 = vunpack.c.l.b16 %v441
        %v1173 = vunpack.c.h.b16 %v441
        %v1174 = vunpack.c.l.b16 %v442
        %v1175 = vunpack.c.h.b16 %v442
        %v1176 = vunpack.c.l.b16 %v443
        %v1177 = vunpack.c.h.b16 %v443
        %v1178 = vunpack.c.l.b16 %v444
        %v1179 = vunpack.c.h.b16 %v444
        %v1180 = vunpack.c.l.b16 %v445
        %v1181 = vunpack.c.h.b16 %v445
        %v1182 = vunpack.c.l.b16 %v446
        %v1183 = vunpack.c.h.b16 %v446
        %v1184 = vunpack.c.l.b16 %v447
        %v1185 = vunpack.c.h.b16 %v447
        %v1186 = vunpack.c.l.b16 %v448
        %v1187 = vunpack.c.h.b16 %v448
        %v1188 = vunpack.c.l.b16 %v449
        %v1189 = vunpack.c.h.b16 %v449
        %v1190 = vunpack.c.l.b16 %v450
        %v1191 = vunpack.c.h.b16 %v450
        %v1192 = vunpack.c.l.b16 %v451
        %v1193 = vunpack.c.h.b16 %v451
        %v1194 = vunpack.c.l.b16 %v452
        %v1195 = vunpack.c.h.b16 %v452
        %v1196 = vunpack.c.l.b16 %v453
        %v1197 = vunpack.c.h.b16 %v453
        %v1198 = vunpack.c.l.b16 %v454
        %v1199 = vunpack.c.h.b16 %v454
        %v1200 = vunpack.c.l.b16 %v455
        %v1201 = vunpack.c.h.b16 %v455
        %v1202 = vunpack.c.l.b16 %v456
        %v1203 = vunpack.c.h.b16 %v456
        %v1204 = vunpack.c.l.b16 %v457
        %v1205 = vunpack.c.h.b16 %v457
        %v1206 = vunpack.c.l.b16 %v458
        %v1207 = vunpack.c.h.b16 %v458
        %v1208 = vunpack.c.l.b16 %v459
        %v1209 = vunpack.c.h.b16 %v459
        %v1210 = vunpack.c.l.b16 %v460
        %v1211 = vunpack.c.h.b16 %v460
        %v1212 = vunpack.c.l.b16 %v461
        %v1213 = vunpack.c.h.b16 %v461
        %v1214 = vunpack.c.l.b16 %v462
        %v1215 = vunpack.c.h.b16 %v462
        %v1216 = vunpack.c.l.b16 %v463
        %v1217 = vunpack.c.h.b16 %v463
        %v1218 = vunpack.c.l.b16 %v464
        %v1219 = vunpack.c.h.b16 %v464
        %v1220 = vunpack.c.l.b16 %v465
        %v1221 = vunpack.c.h.b16 %v465
        %v1222 = vunpack.c.l.b16 %v466
        %v1223 = vunpack.c.h.b16 %v466
        %v1224 = vunpack.c.l.b16 %v467
        %v1225 = vunpack.c.h.b16 %v467
        %v1226 = vunpack.c.l.b16 %v468
        %v1227 = vunpack.c.h.b16 %v468
        %v1228 = vunpack.c.l.b16 %v469
        %v1229 = vunpack.c.h.b16 %v469
        %v1230 = vunpack.c.l.b16 %v470
        %v1231 = vunpack.c.h.b16 %v470
        %v1232 = vunpack.c.l.b16 %v471
        %v1233 = vunpack.c.h.b16 %v471
        %v1234 = vunpack.c.l.b16 %v472
        %v1235 = vunpack.c.h.b16 %v472
        %v1236 = vunpack.c.l.b16 %v473
        %v1237 = vunpack.c.h.b16 %v473
        %v1238 = vunpack.c.l.b16 %v474
        %v1239 = vunpack.c.h.b16 %v474
        %v1240 = vunpack.c.l.b16 %v475
        %v1241 = vunpack.c.h.b16 %v475
        %v1242 = vunpack.c.l.b16 %v476
        %v1243 = vunpack.c.h.b16 %v476
        %v1244 = vunpack.c.l.b16 %v477
        %v1245 = vunpack.c.h.b16 %v477
        %v1246 = vunpack.c.l.b16 %v478
        %v1247 = vunpack.c.h.b16 %v478
        %v1248 = vunpack.c.l.b16 %v479
        %v1249 = vunpack.c.h.b16 %v479
        %v1250 = vunpack.c.l.b16 %v480
        %v1251 = vunpack.c.h.b16 %v480
        %v1252 = vunpack.c.l.b16 %v481
        %v1253 = vunpack.c.h.b16 %v481
        %v1254 = vunpack.c.l.b16 %v482
        %v1255 = vunpack.c.h.b16 %v482
        %v1256 = vunpack.c.l.b16 %v483
        %v1257 = vunpack.c.h.b16 %v483
        %v1258 = vunpack.c.l.b16 %v484
        %v1259 = vunpack.c.h.b16 %v484
        %v1260 = vunpack.c.l.b16 %v485
        %v1261 = vunpack.c.h.b16 %v485
        %v1262 = vunpack.c.l.b16 %v486
        %v1263 = vunpack.c.h.b16 %v486
        %v1264 = vunpack.c.l.b16 %v487
        %v1265 = vunpack.c.h.b16 %v487
        %v1266 = vunpack.c.l.b16 %v488
        %v1267 = vunpack.c.h.b16 %v488
        %v1268 = vunpack.c.l.b16 %v489
        %v1269 = vunpack.c.h.b16 %v489
        %v1270 = vunpack.c.l.b16 %v490
        %v1271 = vunpack.c.h.b16 %v490
        %v1272 = vunpack.c.l.b16 %v491
        %v1273 = vunpack.c.h.b16 %v491
        %v1274 = vunpack.c.l.b16 %v492
        %v1275 = vunpack.c.h.b16 %v492
        %v1276 = vunpack.c.l.b16 %v493
        %v1277 = vunpack.c.h.b16 %v493
        %v1278 = vunpack.c.l.b16 %v494
        %v1279 = vunpack.c.h.b16 %v494
        %v1280 = vunpack.c.l.b16 %v495
        %v1281 = vunpack.c.h.b16 %v495
        %v1282 = vunpack.c.l.b16 %v496
        %v1283 = vunpack.c.h.b16 %v496
        %v1284 = vunpack.c.l.b16 %v497
        %v1285 = vunpack.c.h.b16 %v497
        %v1286 = vunpack.c.l.b16 %v498
        %v1287 = vunpack.c.h.b16 %v498
        %v1288 = vunpack.c.l.b16 %v499
        %v1289 = vunpack.c.h.b16 %v499
        %v1290 = vunpack.c.l.b16 %v500
        %v1291 = vunpack.c.h.b16 %v500
        %v1292 = vunpack.c.l.b16 %v501
        %v1293 = vunpack.c.h.b16 %v501
        %v1294 = vunpack.c.l.b16 %v502
        %v1295 = vunpack.c.h.b16 %v502
        %v1296 = vunpack.c.l.b16 %v503
        %v1297 = vunpack.c.h.b16 %v503
        %v1298 = vunpack.c.l.b16 %v504
        %v1299 = vunpack.c.h.b16 %v504
        %v1300 = vunpack.c.l.b16 %v505
        %v1301 = vunpack.c.h.b16 %v505
        %v1302 = vunpack.c.l.b16 %v506
        %v1303 = vunpack.c.h.b16 %v506
        %v1304 = vunpack.c.l.b16 %v507
        %v1305 = vunpack.c.h.b16 %v507
        %v1306 = vunpack.c.l.b16 %v508
        %v1307 = vunpack.c.h.b16 %v508
        %v1308 = vunpack.c.l.b16 %v509
        %v1309 = vunpack.c.h.b16 %v509
        %v1310 = vunpack.c.l.b16 %v510
        %v1311 = vunpack.c.h.b16 %v510
        %v1312 = vunpack.c.l.b16 %v511
        %v1313 = vunpack.c.h.b16 %v511
        %v1314 = vunpack.c.l.b16 %v512
        %v1315 = vunpack.c.h.b16 %v512
        %v1316 = vunpack.c.l.b16 %v513
        %v1317 = vunpack.c.h.b16 %v513
        %v1318 = vunpack.c.l.b16 %v514
        %v1319 = vunpack.c.h.b16 %v514
        %v1320 = vunpack.c.l.b16 %v515
        %v1321 = vunpack.c.h.b16 %v515
        %v1322 = vunpack.c.l.b16 %v516
        %v1323 = vunpack.c.h.b16 %v516
        %v1324 = vunpack.c.l.b16 %v517
        %v1325 = vunpack.c.h.b16 %v517
        %v1326 = vunpack.c.l.b16 %v518
        %v1327 = vunpack.c.h.b16 %v518
        %v1328 = vunpack.c.l.b16 %v519
        %v1329 = vunpack.c.h.b16 %v519
        %v1330 = vunpack.c.l.b16 %v520
        %v1331 = vunpack.c.h.b16 %v520
        %v1332 = vunpack.c.l.b16 %v521
        %v1333 = vunpack.c.h.b16 %v521
        %v1334 = vunpack.c.l.b16 %v522
        %v1335 = vunpack.c.h.b16 %v522
        %v1336 = vunpack.c.l.b16 %v523
        %v1337 = vunpack.c.h.b16 %v523
        %v1338 = vunpack.c.l.b16 %v524
        %v1339 = vunpack.c.h.b16 %v524
        %v1340 = vunpack.c.l.b16 %v525
        %v1341 = vunpack.c.h.b16 %v525
        %v1342 = vunpack.c.l.b16 %v526
        %v1343 = vunpack.c.h.b16 %v526
        %v1344 = vunpack.c.l.b16 %v527
        %v1345 = vunpack.c.h.b16 %v527
        %v1346 = vunpack.c.l.b16 %v528
        %v1347 = vunpack.c.h.b16 %v528
        %v1348 = vunpack.c.l.b16 %v529
        %v1349 = vunpack.c.h.b16 %v529
        %v1350 = vunpack.c.l.b16 %v530
        %v1351 = vunpack.c.h.b16 %v530
        %v1352 = vunpack.c.l.b16 %v531
        %v1353 = vunpack.c.h.b16 %v531
        %v1354 = vunpack.c.l.b16 %v532
        %v1355 = vunpack.c.h.b16 %v532
        %v1356 = vunpack.c.l.b16 %v533
        %v1357 = vunpack.c.h.b16 %v533
        %v1358 = vunpack.c.l.b16 %v534
        %v1359 = vunpack.c.h.b16 %v534
        %v1360 = vunpack.c.l.b16 %v535
        %v1361 = vunpack.c.h.b16 %v535
        %v1362 = vunpack.c.l.b16 %v536
        %v1363 = vunpack.c.h.b16 %v536
        %v1364 = vunpack.c.l.b16 %v537
        %v1365 = vunpack.c.h.b16 %v537
        %v1366 = vunpack.c.l.b16 %v538
        %v1367 = vunpack.c.h.b16 %v538
        %v1368 = vunpack.c.l.b16 %v539
        %v1369 = vunpack.c.h.b16 %v539
        %v1370 = vunpack.c.l.b16 %v540
        %v1371 = vunpack.c.h.b16 %v540
        %v1372 = vunpack.c.l.b16 %v541
        %v1373 = vunpack.c.h.b16 %v541
        %v1374 = vunpack.c.l.b16 %v542
        %v1375 = vunpack.c.h.b16 %v542
        %v1376 = vunpack.c.l.b16 %v543
        %v1377 = vunpack.c.h.b16 %v543
        %v1378 = vunpack.c.l.b16 %v544
        %v1379 = vunpack.c.h.b16 %v544
        %v1380 = vunpack.c.l.b16 %v545
        %v1381 = vunpack.c.h.b16 %v545
        %v1382 = vunpack.c.l.b16 %v546
        %v1383 = vunpack.c.h.b16 %v546
        %v1384 = vunpack.c.l.b16 %v547
        %v1385 = vunpack.c.h.b16 %v547
        %v1386 = vunpack.c.l.b16 %v548
        %v1387 = vunpack.c.h.b16 %v548
        %v1388 = vunpack.c.l.b16 %v549
        %v1389 = vunpack.c.h.b16 %v549
        %v1390 = vunpack.c.l.b16 %v550
        %v1391 = vunpack.c.h.b16 %v550
        %v1392 = vunpack.c.l.b16 %v551
        %v1393 = vunpack.c.h.b16 %v551
        %v1394 = vunpack.c.l.b16 %v552
        %v1395 = vunpack.c.h.b16 %v552
        %v1396 = vunpack.c.l.b16 %v553
        %v1397 = vunpack.c.h.b16 %v553
        %v1398 = vunpack.c.l.b16 %v554
        %v1399 = vunpack.c.h.b16 %v554
        %v1400 = vunpack.c.l.b16 %v555
        %v1401 = vunpack.c.h.b16 %v555
        %v1402 = vunpack.c.l.b16 %v556
        %v1403 = vunpack.c.h.b16 %v556
        %v1404 = vunpack.c.l.b16 %v557
        %v1405 = vunpack.c.h.b16 %v557
        %v1406 = vunpack.c.l.b16 %v558
        %v1407 = vunpack.c.h.b16 %v558
        %v1408 = vunpack.c.l.b16 %v559
        %v1409 = vunpack.c.h.b16 %v559
        %v1410 = vunpack.c.l.b16 %v560
        %v1411 = vunpack.c.h.b16 %v560
        %v1412 = vunpack.c.l.b16 %v561
        %v1413 = vunpack.c.h.b16 %v561
        %v1414 = vunpack.c.l.b16 %v562
        %v1415 = vunpack.c.h.b16 %v562
        %v1416 = vunpack.c.l.b16 %v563
        %v1417 = vunpack.c.h.b16 %v563
        %v1418 = vunpack.c.l.b16 %v564
        %v1419 = vunpack.c.h.b16 %v564
        %v1420 = vunpack.c.l.b16 %v565
        %v1421 = vunpack.c.h.b16 %v565
        %v1422 = vunpack.c.l.b16 %v566
        %v1423 = vunpack.c.h.b16 %v566
        %v1424 = vunpack.c.l.b16 %v567
        %v1425 = vunpack.c.h.b16 %v567
        %v1426 = vunpack.c.l.b16 %v568
        %v1427 = vunpack.c.h.b16 %v568
        %v1428 = vunpack.c.l.b16 %v569
        %v1429 = vunpack.c.h.b16 %v569
        %v1430 = vunpack.c.l.b16 %v570
        %v1431 = vunpack.c.h.b16 %v570
        %v1432 = vunpack.c.l.b16 %v571
        %v1433 = vunpack.c.h.b16 %v571
        %v1434 = vunpack.c.l.b16 %v572
        %v1435 = vunpack.c.h.b16 %v572
        %v1436 = vunpack.c.l.b16 %v573
        %v1437 = vunpack.c.h.b16 %v573
        %v1438 = vunpack.c.l.b16 %v574
        %v1439 = vunpack.c.h.b16 %v574
        %v1440 = vunpack.c.l.b16 %v575
        %v1441 = vunpack.c.h.b16 %v575
        %v1442 = vunpack.c.l.b16 %v576
        %v1443 = vunpack.c.h.b16 %v576
        %v1444 = vunpack.c.l.b16 %v577
        %v1445 = vunpack.c.h.b16 %v577
        %v1446 = vunpack.c.l.b16 %v578
        %v1447 = vunpack.c.h.b16 %v578
        %v1448 = vunpack.c.l.b16 %v579
        %v1449 = vunpack.c.h.b16 %v579
        %v1450 = vunpack.c.l.b16 %v580
        %v1451 = vunpack.c.h.b16 %v580
        %v1452 = vunpack.c.l.b16 %v581
        %v1453 = vunpack.c.h.b16 %v581
        %v1454 = vunpack.c.l.b16 %v582
        %v1455 = vunpack.c.h.b16 %v582
        %v1456 = vunpack.c.l.b16 %v583
        %v1457 = vunpack.c.h.b16 %v583
        %v1458 = vunpack.c.l.b16 %v584
        %v1459 = vunpack.c.h.b16 %v584
        %v1460 = vunpack.c.l.b16 %v585
        %v1461 = vunpack.c.h.b16 %v585
        %v1462 = vunpack.c.l.b16 %v586
        %v1463 = vunpack.c.h.b16 %v586
        %v1464 = vunpack.c.l.b16 %v587
        %v1465 = vunpack.c.h.b16 %v587
        %v1466 = vunpack.c.l.b16 %v588
        %v1467 = vunpack.c.h.b16 %v588
        %v1468 = vunpack.c.l.b16 %v589
        %v1469 = vunpack.c.h.b16 %v589
        %v1470 = vunpack.c.l.b16 %v590
        %v1471 = vunpack.c.h.b16 %v590
        %v1472 = vunpack.c.l.b16 %v591
        %v1473 = vunpack.c.h.b16 %v591
        %v1474 = vunpack.c.l.b16 %v592
        %v1475 = vunpack.c.h.b16 %v592
        %v1476 = vunpack.c.l.b16 %v593
        %v1477 = vunpack.c.h.b16 %v593
        %v1478 = vunpack.c.l.b16 %v594
        %v1479 = vunpack.c.h.b16 %v594
        %v1480 = vunpack.c.l.b16 %v595
        %v1481 = vunpack.c.h.b16 %v595
        %v1482 = vunpack.c.l.b16 %v596
        %v1483 = vunpack.c.h.b16 %v596
        %v1484 = vunpack.c.l.b16 %v597
        %v1485 = vunpack.c.h.b16 %v597
        %v1486 = vunpack.c.l.b16 %v598
        %v1487 = vunpack.c.h.b16 %v598
        %v1488 = vunpack.c.l.b16 %v599
        %v1489 = vunpack.c.h.b16 %v599
        %v1490 = vunpack.c.l.b16 %v600
        %v1491 = vunpack.c.h.b16 %v600
        %v1492 = vunpack.c.l.b16 %v601
        %v1493 = vunpack.c.h.b16 %v601
        %v1494 = vunpack.c.l.b16 %v602
        %v1495 = vunpack.c.h.b16 %v602
        %v1496 = vunpack.c.l.b16 %v603
        %v1497 = vunpack.c.h.b16 %v603
        %v1498 = vunpack.c.l.b16 %v604
        %v1499 = vunpack.c.h.b16 %v604
        %v1500 = vunpack.c.l.b16 %v605
        %v1501 = vunpack.c.h.b16 %v605
        %v1502 = vunpack.c.l.b16 %v606
        %v1503 = vunpack.c.h.b16 %v606
        %v1504 = vunpack.c.l.b16 %v607
        %v1505 = vunpack.c.h.b16 %v607
        %v1506 = vunpack.c.l.b16 %v608
        %v1507 = vunpack.c.h.b16 %v608
        %v1508 = vunpack.c.l.b16 %v609
        %v1509 = vunpack.c.h.b16 %v609
        %v1510 = vunpack.c.l.b16 %v610
        %v1511 = vunpack.c.h.b16 %v610
        %v1512 = vunpack.c.l.b16 %v611
        %v1513 = vunpack.c.h.b16 %v611
        %v1514 = vunpack.c.l.b16 %v612
        %v1515 = vunpack.c.h.b16 %v612
        %v1516 = vunpack.c.l.b16 %v613
        %v1517 = vunpack.c.h.b16 %v613
        %v1518 = vunpack.c.l.b16 %v614
        %v1519 = vunpack.c.h.b16 %v614
        %v1520 = vunpack.c.l.b16 %v615
        %v1521 = vunpack.c.h.b16 %v615
        %v1522 = vunpack.c.l.b16 %v616
        %v1523 = vunpack.c.h.b16 %v616
        %v1524 = vunpack.c.l.b16 %v617
        %v1525 = vunpack.c.h.b16 %v617
        %v1526 = vunpack.c.l.b16 %v618
        %v1527 = vunpack.c.h.b16 %v618
        %v1528 = vunpack.c.l.b16 %v619
        %v1529 = vunpack.c.h.b16 %v619
        %v1530 = vpack.c.b16 %v958, %v954
        %v1531 = vpack.c.b16 %v959, %v955
        %v1532 = vpack.c.b16 %v960, %v956
        %v1533 = vpack.c.b16 %v961, %v957
        %v1534 = vpack.c.b16 %v966, %v962
        %v1535 = vpack.c.b16 %v967, %v963
        %v1536 = vpack.c.b16 %v968, %v964
        %v1537 = vpack.c.b16 %v969, %v965
        %v1538 = vpack.c.b16 %v974, %v970
        %v1539 = vpack.c.b16 %v975, %v971
        %v1540 = vpack.c.b16 %v976, %v972
        %v1541 = vpack.c.b16 %v977, %v973
        %v1542 = vpack.c.b16 %v982, %v978
        %v1543 = vpack.c.b16 %v983, %v979
        %v1544 = vpack.c.b16 %v984, %v980
        %v1545 = vpack.c.b16 %v985, %v981
        %v1546 = vpack.c.b16 %v990, %v986
        %v1547 = vpack.c.b16 %v991, %v987
        %v1548 = vpack.c.b16 %v992, %v988
        %v1549 = vpack.c.b16 %v993, %v989
        %v1550 = vpack.c.b16 %v998, %v994
        %v1551 = vpack.c.b16 %v999, %v995
        %v1552 = vpack.c.b16 %v1000, %v996
        %v1553 = vpack.c.b16 %v1001, %v997
        %v1554 = vpack.c.b16 %v1006, %v1002
        %v1555 = vpack.c.b16 %v1007, %v1003
        %v1556 = vpack.c.b16 %v1008, %v1004
        %v1557 = vpack.c.b16 %v1009, %v1005
        %v1558 = vpack.c.b16 %v1014, %v1010
        %v1559 = vpack.c.b16 %v1015, %v1011
        %v1560 = vpack.c.b16 %v1016, %v1012
        %v1561 = vpack.c.b16 %v1017, %v1013
        %v1562 = vpack.c.b16 %v1022, %v1018
        %v1563 = vpack.c.b16 %v1023, %v1019
        %v1564 = vpack.c.b16 %v1024, %v1020
        %v1565 = vpack.c.b16 %v1025, %v1021
        %v1566 = vpack.c.b16 %v1030, %v1026
        %v1567 = vpack.c.b16 %v1031, %v1027
        %v1568 = vpack.c.b16 %v1032, %v1028
        %v1569 = vpack.c.b16 %v1033, %v1029
        %v1570 = vpack.c.b16 %v1038, %v1034
        %v1571 = vpack.c.b16 %v1039, %v1035
        %v1572 = vpack.c.b16 %v1040, %v1036
        %v1573 = vpack.c.b16 %v1041, %v1037
        %v1574 = vpack.c.b16 %v1046, %v1042
        %v1575 = vpack.c.b16 %v1047, %v1043
        %v1576 = vpack.c.b16 %v1048, %v1044
        %v1577 = vpack.c.b16 %v1049, %v1045
        %v1578 = vpack.c.b16 %v1054, %v1050
        %v1579 = vpack.c.b16 %v1055, %v1051
        %v1580 = vpack.c.b16 %v1056, %v1052
        %v1581 = vpack.c.b16 %v1057, %v1053
        %v1582 = vpack.c.b16 %v1062, %v1058
        %v1583 = vpack.c.b16 %v1063, %v1059
        %v1584 = vpack.c.b16 %v1064, %v1060
        %v1585 = vpack.c.b16 %v1065, %v1061
        %v1586 = vpack.c.b16 %v1070, %v1066
        %v1587 = vpack.c.b16 %v1071, %v1067
        %v1588 = vpack.c.b16 %v1072, %v1068
        %v1589 = vpack.c.b16 %v1073, %v1069
        %v1590 = vpack.c.b16 %v1078, %v1074
        %v1591 = vpack.c.b16 %v1079, %v1075
        %v1592 = vpack.c.b16 %v1080, %v1076
        %v1593 = vpack.c.b16 %v1081, %v1077
        %v1594 = vpack.c.b16 %v1086, %v1082
        %v1595 = vpack.c.b16 %v1087, %v1083
        %v1596 = vpack.c.b16 %v1088, %v1084
        %v1597 = vpack.c.b16 %v1089, %v1085
        %v1598 = vpack.c.b16 %v1094, %v1090
        %v1599 = vpack.c.b16 %v1095, %v1091
        %v1600 = vpack.c.b16 %v1096, %v1092
        %v1601 = vpack.c.b16 %v1097, %v1093
        %v1602 = vpack.c.b16 %v1102, %v1098
        %v1603 = vpack.c.b16 %v1103, %v1099
        %v1604 = vpack.c.b16 %v1104, %v1100
        %v1605 = vpack.c.b16 %v1105, %v1101
        %v1606 = vpack.c.b16 %v1110, %v1106
        %v1607 = vpack.c.b16 %v1111, %v1107
        %v1608 = vpack.c.b16 %v1112, %v1108
        %v1609 = vpack.c.b16 %v1113, %v1109
        %v1610 = vpack.c.b16 %v1118, %v1114
        %v1611 = vpack.c.b16 %v1119, %v1115
        %v1612 = vpack.c.b16 %v1120, %v1116
        %v1613 = vpack.c.b16 %v1121, %v1117
        %v1614 = vpack.c.b16 %v1126, %v1122
        %v1615 = vpack.c.b16 %v1127, %v1123
        %v1616 = vpack.c.b16 %v1128, %v1124
        %v1617 = vpack.c.b16 %v1129, %v1125
        %v1618 = vpack.c.b16 %v1134, %v1130
        %v1619 = vpack.c.b16 %v1135, %v1131
        %v1620 = vpack.c.b16 %v1136, %v1132
        %v1621 = vpack.c.b16 %v1137, %v1133
        %v1622 = vpack.c.b16 %v1142, %v1138
        %v1623 = vpack.c.b16 %v1143, %v1139
        %v1624 = vpack.c.b16 %v1144, %v1140
        %v1625 = vpack.c.b16 %v1145, %v1141
        %v1626 = vpack.c.b16 %v1150, %v1146
        %v1627 = vpack.c.b16 %v1151, %v1147
        %v1628 = vpack.c.b16 %v1152, %v1148
        %v1629 = vpack.c.b16 %v1153, %v1149
        %v1630 = vpack.c.b16 %v1158, %v1154
        %v1631 = vpack.c.b16 %v1159, %v1155
        %v1632 = vpack.c.b16 %v1160, %v1156
        %v1633 = vpack.c.b16 %v1161, %v1157
        %v1634 = vpack.c.b16 %v1166, %v1162
        %v1635 = vpack.c.b16 %v1167, %v1163
        %v1636 = vpack.c.b16 %v1168, %v1164
        %v1637 = vpack.c.b16 %v1169, %v1165
        %v1638 = vpack.c.b16 %v1174, %v1170
        %v1639 = vpack.c.b16 %v1175, %v1171
        %v1640 = vpack.c.b16 %v1176, %v1172
        %v1641 = vpack.c.b16 %v1177, %v1173
        %v1642 = vpack.c.b16 %v1182, %v1178
        %v1643 = vpack.c.b16 %v1183, %v1179
        %v1644 = vpack.c.b16 %v1184, %v1180
        %v1645 = vpack.c.b16 %v1185, %v1181
        %v1646 = vpack.c.b16 %v1190, %v1186
        %v1647 = vpack.c.b16 %v1191, %v1187
        %v1648 = vpack.c.b16 %v1192, %v1188
        %v1649 = vpack.c.b16 %v1193, %v1189
        %v1650 = vpack.c.b16 %v1198, %v1194
        %v1651 = vpack.c.b16 %v1199, %v1195
        %v1652 = vpack.c.b16 %v1200, %v1196
        %v1653 = vpack.c.b16 %v1201, %v1197
        %v1654 = vpack.c.b16 %v1206, %v1202
        %v1655 = vpack.c.b16 %v1207, %v1203
        %v1656 = vpack.c.b16 %v1208, %v1204
        %v1657 = vpack.c.b16 %v1209, %v1205
        %v1658 = vpack.c.b16 %v1214, %v1210
        %v1659 = vpack.c.b16 %v1215, %v1211
        %v1660 = vpack.c.b16 %v1216, %v1212
        %v1661 = vpack.c.b16 %v1217, %v1213
        %v1662 = vpack.c.b16 %v1222, %v1218
        %v1663 = vpack.c.b16 %v1223, %v1219
        %v1664 = vpack.c.b16 %v1224, %v1220
        %v1665 = vpack.c.b16 %v1225, %v1221
        %v1666 = vpack.c.b16 %v1230, %v1226
        %v1667 = vpack.c.b16 %v1231, %v1227
        %v1668 = vpack.c.b16 %v1232, %v1228
        %v1669 = vpack.c.b16 %v1233, %v1229
        %v1670 = vpack.c.b16 %v1238, %v1234
        %v1671 = vpack.c.b16 %v1239, %v1235
        %v1672 = vpack.c.b16 %v1240, %v1236
        %v1673 = vpack.c.b16 %v1241, %v1237
        %v1674 = vpack.c.b16 %v1246, %v1242
        %v1675 = vpack.c.b16 %v1247, %v1243
        %v1676 = vpack.c.b16 %v1248, %v1244
        %v1677 = vpack.c.b16 %v1249, %v1245
        %v1678 = vpack.c.b16 %v1254, %v1250
        %v1679 = vpack.c.b16 %v1255, %v1251
        %v1680 = vpack.c.b16 %v1256, %v1252
        %v1681 = vpack.c.b16 %v1257, %v1253
        %v1682 = vpack.c.b16 %v1262, %v1258
        %v1683 = vpack.c.b16 %v1263, %v1259
        %v1684 = vpack.c.b16 %v1264, %v1260
        %v1685 = vpack.c.b16 %v1265, %v1261
        %v1686 = vpack.c.b16 %v1270, %v1266
        %v1687 = vpack.c.b16 %v1271, %v1267
        %v1688 = vpack.c.b16 %v1272, %v1268
        %v1689 = vpack.c.b16 %v1273, %v1269
        %v1690 = vpack.c.b16 %v1278, %v1274
        %v1691 = vpack.c.b16 %v1279, %v1275
        %v1692 = vpack.c.b16 %v1280, %v1276
        %v1693 = vpack.c.b16 %v1281, %v1277
        %v1694 = vpack.c.b16 %v1286, %v1282
        %v1695 = vpack.c.b16 %v1287, %v1283
        %v1696 = vpack.c.b16 %v1288, %v1284
        %v1697 = vpack.c.b16 %v1289, %v1285
        %v1698 = vpack.c.b16 %v1294, %v1290
        %v1699 = vpack.c.b16 %v1295, %v1291
        %v1700 = vpack.c.b16 %v1296, %v1292
        %v1701 = vpack.c.b16 %v1297, %v1293
        %v1702 = vpack.c.b16 %v1302, %v1298
        %v1703 = vpack.c.b16 %v1303, %v1299
        %v1704 = vpack.c.b16 %v1304, %v1300
        %v1705 = vpack.c.b16 %v1305, %v1301
        %v1706 = vpack.c.b16 %v1310, %v1306
        %v1707 = vpack.c.b16 %v1311, %v1307
        %v1708 = vpack.c.b16 %v1312, %v1308
        %v1709 = vpack.c.b16 %v1313, %v1309
        %v1710 = vpack.c.b16 %v1318, %v1314
        %v1711 = vpack.c.b16 %v1319, %v1315
        %v1712 = vpack.c.b16 %v1320, %v1316
        %v1713 = vpack.c.b16 %v1321, %v1317
        %v1714 = vpack.c.b16 %v1326, %v1322
        %v1715 = vpack.c.b16 %v1327, %v1323
        %v1716 = vpack.c.b16 %v1328, %v1324
        %v1717 = vpack.c.b16 %v1329, %v1325
        %v1718 = vpack.c.b16 %v1334, %v1330
        %v1719 = vpack.c.b16 %v1335, %v1331
        %v1720 = vpack.c.b16 %v1336, %v1332
        %v1721 = vpack.c.b16 %v1337, %v1333
        %v1722 = vpack.c.b16 %v1342, %v1338
        %v1723 = vpack.c.b16 %v1343, %v1339
        %v1724 = vpack.c.b16 %v1344, %v1340
        %v1725 = vpack.c.b16 %v1345, %v1341
        %v1726 = vpack.c.b16 %v1350, %v1346
        %v1727 = vpack.c.b16 %v1351, %v1347
        %v1728 = vpack.c.b16 %v1352, %v1348
        %v1729 = vpack.c.b16 %v1353, %v1349
        %v1730 = vpack.c.b16 %v1358, %v1354
        %v1731 = vpack.c.b16 %v1359, %v1355
        %v1732 = vpack.c.b16 %v1360, %v1356
        %v1733 = vpack.c.b16 %v1361, %v1357
        %v1734 = vpack.c.b16 %v1366, %v1362
        %v1735 = vpack.c.b16 %v1367, %v1363
        %v1736 = vpack.c.b16 %v1368, %v1364
        %v1737 = vpack.c.b16 %v1369, %v1365
        %v1738 = vpack.c.b16 %v1374, %v1370
        %v1739 = vpack.c.b16 %v1375, %v1371
        %v1740 = vpack.c.b16 %v1376, %v1372
        %v1741 = vpack.c.b16 %v1377, %v1373
        %v1742 = vpack.c.b16 %v1382, %v1378
        %v1743 = vpack.c.b16 %v1383, %v1379
        %v1744 = vpack.c.b16 %v1384, %v1380
        %v1745 = vpack.c.b16 %v1385, %v1381
        %v1746 = vpack.c.b16 %v1390, %v1386
        %v1747 = vpack.c.b16 %v1391, %v1387
        %v1748 = vpack.c.b16 %v1392, %v1388
        %v1749 = vpack.c.b16 %v1393, %v1389
        %v1750 = vpack.c.b16 %v1398, %v1394
        %v1751 = vpack.c.b16 %v1399, %v1395
        %v1752 = vpack.c.b16 %v1400, %v1396
        %v1753 = vpack.c.b16 %v1401, %v1397
        %v1754 = vpack.c.b16 %v1406, %v1402
        %v1755 = vpack.c.b16 %v1407, %v1403
        %v1756 = vpack.c.b16 %v1408, %v1404
        %v1757 = vpack.c.b16 %v1409, %v1405
        %v1758 = vpack.c.b16 %v1414, %v1410
        %v1759 = vpack.c.b16 %v1415, %v1411
        %v1760 = vpack.c.b16 %v1416, %v1412
        %v1761 = vpack.c.b16 %v1417, %v1413
        %v1762 = vpack.c.b16 %v1422, %v1418
        %v1763 = vpack.c.b16 %v1423, %v1419
        %v1764 = vpack.c.b16 %v1424, %v1420
        %v1765 = vpack.c.b16 %v1425, %v1421
        %v1766 = vpack.c.b16 %v1430, %v1426
        %v1767 = vpack.c.b16 %v1431, %v1427
        %v1768 = vpack.c.b16 %v1432, %v1428
        %v1769 = vpack.c.b16 %v1433, %v1429
        %v1770 = vpack.c.b16 %v1438, %v1434
        %v1771 = vpack.c.b16 %v1439, %v1435
        %v1772 = vpack.c.b16 %v1440, %v1436
        %v1773 = vpack.c.b16 %v1441, %v1437
        %v1774 = vpack.c.b16 %v1446, %v1442
        %v1775 = vpack.c.b16 %v1447, %v1443
        %v1776 = vpack.c.b16 %v1448, %v1444
        %v1777 = vpack.c.b16 %v1449, %v1445
        %v1778 = vpack.c.b16 %v1454, %v1450
        %v1779 = vpack.c.b16 %v1455, %v1451
        %v1780 = vpack.c.b16 %v1456, %v1452
        %v1781 = vpack.c.b16 %v1457, %v1453
        %v1782 = vpack.c.b16 %v1462, %v1458
        %v1783 = vpack.c.b16 %v1463, %v1459
        %v1784 = vpack.c.b16 %v1464, %v1460
        %v1785 = vpack.c.b16 %v1465, %v1461
        %v1786 = vpack.c.b16 %v1470, %v1466
        %v1787 = vpack.c.b16 %v1471, %v1467
        %v1788 = vpack.c.b16 %v1472, %v1468
        %v1789 = vpack.c.b16 %v1473, %v1469
        %v1790 = vpack.c.b16 %v1478, %v1474
        %v1791 = vpack.c.b16 %v1479, %v1475
        %v1792 = vpack.c.b16 %v1480, %v1476
        %v1793 = vpack.c.b16 %v1481, %v1477
        %v1794 = vpack.c.b16 %v1486, %v1482
        %v1795 = vpack.c.b16 %v1487, %v1483
        %v1796 = vpack.c.b16 %v1488, %v1484
        %v1797 = vpack.c.b16 %v1489, %v1485
        %v1798 = vpack.c.b16 %v1494, %v1490
        %v1799 = vpack.c.b16 %v1495, %v1491
        %v1800 = vpack.c.b16 %v1496, %v1492
        %v1801 = vpack.c.b16 %v1497, %v1493
        %v1802 = vpack.c.b16 %v1502, %v1498
        %v1803 = vpack.c.b16 %v1503, %v1499
        %v1804 = vpack.c.b16 %v1504, %v1500
        %v1805 = vpack.c.b16 %v1505, %v1501
        %v1806 = vpack.c.b16 %v1510, %v1506
        %v1807 = vpack.c.b16 %v1511, %v1507
        %v1808 = vpack.c.b16 %v1512, %v1508
        %v1809 = vpack.c.b16 %v1513, %v1509
        %v1810 = vpack.c.b16 %v1518, %v1514
        %v1811 = vpack.c.b16 %v1519, %v1515
        %v1812 = vpack.c.b16 %v1520, %v1516
        %v1813 = vpack.c.b16 %v1521, %v1517
        %v1814 = vpack.c.b16 %v1526, %v1522
        %v1815 = vpack.c.b16 %v1527, %v1523
        %v1816 = vpack.c.b16 %v1528, %v1524
        %v1817 = vpack.c.b16 %v1529, %v1525
        %2106 = vmatprep.subr.bf16.mxu0 %v1559
        %2107 = vmatpush1.bf16.msra.mxu0 %v1558
        %2108 = vmatprep.subr.bf16.mxu0 %v1555
        %2109 = vmatpush1.bf16.msra.mxu0 %v1554
        %2110 = vmatprep.subr.bf16.mxu0 %v1551
        %2111 = vmatpush1.bf16.msra.mxu0 %v1550
        %2112 = vmatprep.subr.bf16.mxu0 %v1547
        %2113 = vmatpush1.bf16.msra.mxu0 %v1546
        %2114 = vmatprep.subr.bf16.mxu0 %v1543
        %2115 = vmatpush1.bf16.msra.mxu0 %v1542
        %2116 = vmatprep.subr.bf16.mxu0 %v1539
        %2117 = vmatpush1.bf16.msra.mxu0 %v1538
        %2118 = vmatprep.subr.bf16.mxu0 %v1535
        %2119 = vmatpush1.bf16.msra.mxu0 %v1534
        %2120 = vmatprep.subr.bf16.mxu0 %v1531
        %2121 = vmatpush1.bf16.msra.mxu0 %v1530
        %2122 = vmatprep.subr.bf16.mxu0 %v1591
        %2123 = vmatpush2.bf16.msra.mxu0 %v1590
        %2124 = vmatprep.subr.bf16.mxu0 %v1587
        %2125 = vmatpush2.bf16.msra.mxu0 %v1586
        %2126 = vmatprep.subr.bf16.mxu0 %v1583
        %2127 = vmatpush2.bf16.msra.mxu0 %v1582
        %2128 = vmatprep.subr.bf16.mxu0 %v1579
        %2129 = vmatpush2.bf16.msra.mxu0 %v1578
        %2130 = vmatprep.subr.bf16.mxu0 %v1575
        %2131 = vmatpush2.bf16.msra.mxu0 %v1574
        %2132 = vmatprep.subr.bf16.mxu0 %v1571
        %2133 = vmatpush2.bf16.msra.mxu0 %v1570
        %2134 = vmatprep.subr.bf16.mxu0 %v1567
        %2135 = vmatpush2.bf16.msra.mxu0 %v1566
        %2136 = vmatprep.subr.bf16.mxu0 %v1563
        %2137 = vmatpush2.bf16.msra.mxu0 %v1562
        %2138 = vmatprep.mubr.bf16.mxu0 %v649
        %2139 = vmatmul.mubr.bf16.gmra.mxu0 %v648
        %v2140 = vpop.f32.mrf.mxu0
        %v2141 = vadd.f32 0.0, %v2140
        %v2142 = vpop.f32.mrf.mxu0
        %v2143 = vadd.f32 0.0, %v2142
        %v2144 = vpop.f32.mrf.mxu0
        %v2145 = vadd.f32 0.0, %v2144
        %v2146 = vpop.f32.mrf.mxu0
        %v2147 = vadd.f32 0.0, %v2146
        %2148 = vdwg.mxu0
        %2149 = vmatprep.subr.bf16.mxu0 %v1623
        %2150 = vmatpush1.bf16.msra.mxu0 %v1622
        %2151 = vmatprep.subr.bf16.mxu0 %v1619
        %2152 = vmatpush1.bf16.msra.mxu0 %v1618
        %2153 = vmatprep.subr.bf16.mxu0 %v1615
        %2154 = vmatpush1.bf16.msra.mxu0 %v1614
        %2155 = vmatprep.subr.bf16.mxu0 %v1611
        %2156 = vmatpush1.bf16.msra.mxu0 %v1610
        %2157 = vmatprep.subr.bf16.mxu0 %v1607
        %2158 = vmatpush1.bf16.msra.mxu0 %v1606
        %2159 = vmatprep.subr.bf16.mxu0 %v1603
        %2160 = vmatpush1.bf16.msra.mxu0 %v1602
        %2161 = vmatprep.subr.bf16.mxu0 %v1599
        %2162 = vmatpush1.bf16.msra.mxu0 %v1598
        %2163 = vmatprep.subr.bf16.mxu0 %v1595
        %2164 = vmatpush1.bf16.msra.mxu0 %v1594
        %2165 = vmatprep.subr.bf16.mxu0 %v1655
        %2166 = vmatpush2.bf16.msra.mxu0 %v1654
        %2167 = vmatprep.subr.bf16.mxu0 %v1651
        %2168 = vmatpush2.bf16.msra.mxu0 %v1650
        %2169 = vmatprep.subr.bf16.mxu0 %v1647
        %2170 = vmatpush2.bf16.msra.mxu0 %v1646
        %2171 = vmatprep.subr.bf16.mxu0 %v1643
        %2172 = vmatpush2.bf16.msra.mxu0 %v1642
        %2173 = vmatprep.subr.bf16.mxu0 %v1639
        %2174 = vmatpush2.bf16.msra.mxu0 %v1638
        %2175 = vmatprep.subr.bf16.mxu0 %v1635
        %2176 = vmatpush2.bf16.msra.mxu0 %v1634
        %2177 = vmatprep.subr.bf16.mxu0 %v1631
        %2178 = vmatpush2.bf16.msra.mxu0 %v1630
        %2179 = vmatprep.subr.bf16.mxu0 %v1627
        %2180 = vmatpush2.bf16.msra.mxu0 %v1626
        %2181 = vmatprep.mubr.bf16.mxu0 %v651
        %2182 = vmatmul.mubr.bf16.gmra.mxu0 %v650
        %v2183 = vpop.f32.mrf.mxu0
        %v2184 = vadd.f32 %v2141, %v2183
        %v2185 = vpop.f32.mrf.mxu0
        %v2186 = vadd.f32 %v2143, %v2185
        %v2187 = vpop.f32.mrf.mxu0
        %v2188 = vadd.f32 %v2145, %v2187
        %v2189 = vpop.f32.mrf.mxu0
        %v2190 = vadd.f32 %v2147, %v2189
        %2191 = vdwg.mxu0
        %2192 = vmatprep.subr.bf16.mxu0 %v1687
        %2193 = vmatpush1.bf16.msra.mxu0 %v1686
        %2194 = vmatprep.subr.bf16.mxu0 %v1683
        %2195 = vmatpush1.bf16.msra.mxu0 %v1682
        %2196 = vmatprep.subr.bf16.mxu0 %v1679
        %2197 = vmatpush1.bf16.msra.mxu0 %v1678
        %2198 = vmatprep.subr.bf16.mxu0 %v1675
        %2199 = vmatpush1.bf16.msra.mxu0 %v1674
        %2200 = vmatprep.subr.bf16.mxu0 %v1671
        %2201 = vmatpush1.bf16.msra.mxu0 %v1670
        %2202 = vmatprep.subr.bf16.mxu0 %v1667
        %2203 = vmatpush1.bf16.msra.mxu0 %v1666
        %2204 = vmatprep.subr.bf16.mxu0 %v1663
        %2205 = vmatpush1.bf16.msra.mxu0 %v1662
        %2206 = vmatprep.subr.bf16.mxu0 %v1659
        %2207 = vmatpush1.bf16.msra.mxu0 %v1658
        %2208 = vmatprep.subr.bf16.mxu0 %v1719
        %2209 = vmatpush2.bf16.msra.mxu0 %v1718
        %2210 = vmatprep.subr.bf16.mxu0 %v1715
        %2211 = vmatpush2.bf16.msra.mxu0 %v1714
        %2212 = vmatprep.subr.bf16.mxu0 %v1711
        %2213 = vmatpush2.bf16.msra.mxu0 %v1710
        %2214 = vmatprep.subr.bf16.mxu0 %v1707
        %2215 = vmatpush2.bf16.msra.mxu0 %v1706
        %2216 = vmatprep.subr.bf16.mxu0 %v1703
        %2217 = vmatpush2.bf16.msra.mxu0 %v1702
        %2218 = vmatprep.subr.bf16.mxu0 %v1699
        %2219 = vmatpush2.bf16.msra.mxu0 %v1698
        %2220 = vmatprep.subr.bf16.mxu0 %v1695
        %2221 = vmatpush2.bf16.msra.mxu0 %v1694
        %2222 = vmatprep.subr.bf16.mxu0 %v1691
        %2223 = vmatpush2.bf16.msra.mxu0 %v1690
        %2224 = vmatprep.mubr.bf16.mxu0 %v653
        %2225 = vmatmul.mubr.bf16.gmra.mxu0 %v652
        %v2226 = vpop.f32.mrf.mxu0
        %v2227 = vadd.f32 %v2184, %v2226
        %v2228 = vpop.f32.mrf.mxu0
        %v2229 = vadd.f32 %v2186, %v2228
        %v2230 = vpop.f32.mrf.mxu0
        %v2231 = vadd.f32 %v2188, %v2230
        %v2232 = vpop.f32.mrf.mxu0
        %v2233 = vadd.f32 %v2190, %v2232
        %2234 = vdwg.mxu0
        %2235 = vmatprep.subr.bf16.mxu0 %v1751
        %2236 = vmatpush1.bf16.msra.mxu0 %v1750
        %2237 = vmatprep.subr.bf16.mxu0 %v1747
        %2238 = vmatpush1.bf16.msra.mxu0 %v1746
        %2239 = vmatprep.subr.bf16.mxu0 %v1743
        %2240 = vmatpush1.bf16.msra.mxu0 %v1742
        %2241 = vmatprep.subr.bf16.mxu0 %v1739
        %2242 = vmatpush1.bf16.msra.mxu0 %v1738
        %2243 = vmatprep.subr.bf16.mxu0 %v1735
        %2244 = vmatpush1.bf16.msra.mxu0 %v1734
        %2245 = vmatprep.subr.bf16.mxu0 %v1731
        %2246 = vmatpush1.bf16.msra.mxu0 %v1730
        %2247 = vmatprep.subr.bf16.mxu0 %v1727
        %2248 = vmatpush1.bf16.msra.mxu0 %v1726
        %2249 = vmatprep.subr.bf16.mxu0 %v1723
        %2250 = vmatpush1.bf16.msra.mxu0 %v1722
        %2251 = vmatprep.subr.bf16.mxu0 %v1783
        %2252 = vmatpush2.bf16.msra.mxu0 %v1782
        %2253 = vmatprep.subr.bf16.mxu0 %v1779
        %2254 = vmatpush2.bf16.msra.mxu0 %v1778
        %2255 = vmatprep.subr.bf16.mxu0 %v1775
        %2256 = vmatpush2.bf16.msra.mxu0 %v1774
        %2257 = vmatprep.subr.bf16.mxu0 %v1771
        %2258 = vmatpush2.bf16.msra.mxu0 %v1770
        %2259 = vmatprep.subr.bf16.mxu0 %v1767
        %2260 = vmatpush2.bf16.msra.mxu0 %v1766
        %2261 = vmatprep.subr.bf16.mxu0 %v1763
        %2262 = vmatpush2.bf16.msra.mxu0 %v1762
        %2263 = vmatprep.subr.bf16.mxu0 %v1759
        %2264 = vmatpush2.bf16.msra.mxu0 %v1758
        %2265 = vmatprep.subr.bf16.mxu0 %v1755
        %2266 = vmatpush2.bf16.msra.mxu0 %v1754
        %2267 = vmatprep.mubr.bf16.mxu0 %v655
        %2268 = vmatmul.mubr.bf16.gmra.mxu0 %v654
        %v2269 = vpop.f32.mrf.mxu0
        %v2270 = vadd.f32 %v2227, %v2269
        %v2271 = vpop.f32.mrf.mxu0
        %v2272 = vadd.f32 %v2229, %v2271
        %v2273 = vpop.f32.mrf.mxu0
        %v2274 = vadd.f32 %v2231, %v2273
        %v2275 = vpop.f32.mrf.mxu0
        %v2276 = vadd.f32 %v2233, %v2275
        %2277 = vdwg.mxu0
        %2278 = vmatprep.subr.bf16.mxu0 %v1815
        %2279 = vmatpush1.bf16.msra.mxu0 %v1814
        %2280 = vmatprep.subr.bf16.mxu0 %v1811
        %2281 = vmatpush1.bf16.msra.mxu0 %v1810
        %2282 = vmatprep.subr.bf16.mxu0 %v1807
        %2283 = vmatpush1.bf16.msra.mxu0 %v1806
        %2284 = vmatprep.subr.bf16.mxu0 %v1803
        %2285 = vmatpush1.bf16.msra.mxu0 %v1802
        %2286 = vmatprep.subr.bf16.mxu0 %v1799
        %2287 = vmatpush1.bf16.msra.mxu0 %v1798
        %2288 = vmatprep.subr.bf16.mxu0 %v1795
        %2289 = vmatpush1.bf16.msra.mxu0 %v1794
        %2290 = vmatprep.subr.bf16.mxu0 %v1791
        %2291 = vmatpush1.bf16.msra.mxu0 %v1790
        %2292 = vmatprep.subr.bf16.mxu0 %v1787
        %2293 = vmatpush1.bf16.msra.mxu0 %v1786
        %2294 = vmatprep.subr.bf16.mxu0 0
        %2295 = vmatpush2.bf16.msra.mxu0 0
        %2296 = vmatprep.subr.bf16.mxu0 0
        %2297 = vmatpush2.bf16.msra.mxu0 0
        %2298 = vmatprep.subr.bf16.mxu0 0
        %2299 = vmatpush2.bf16.msra.mxu0 0
        %2300 = vmatprep.subr.bf16.mxu0 0
        %2301 = vmatpush2.bf16.msra.mxu0 0
        %2302 = vmatprep.subr.bf16.mxu0 0
        %2303 = vmatpush2.bf16.msra.mxu0 0
        %2304 = vmatprep.subr.bf16.mxu0 0
        %2305 = vmatpush2.bf16.msra.mxu0 0
        %2306 = vmatprep.subr.bf16.mxu0 0
        %2307 = vmatpush2.bf16.msra.mxu0 0
        %2308 = vmatprep.subr.bf16.mxu0 0
        %2309 = vmatpush2.bf16.msra.mxu0 0
        %2310 = vmatprep.mubr.bf16.mxu0 0
        %2311 = vmatmul.mubr.bf16.gmra.mxu0 %v656
        %v2312 = vpop.f32.mrf.mxu0
        %v2313 = vadd.f32 %v2270, %v2312
        %v2314 = vpop.f32.mrf.mxu0
        %v2315 = vadd.f32 %v2272, %v2314
        %v2316 = vpop.f32.mrf.mxu0
        %v2317 = vadd.f32 %v2274, %v2316
        %v2318 = vpop.f32.mrf.mxu0
        %v2319 = vadd.f32 %v2276, %v2318
        %2320 = vdwg.mxu0
        %2321 = vmatprep.subr.bf16.mxu0 %v1561
        %2322 = vmatpush1.bf16.msra.mxu0 %v1560
        %2323 = vmatprep.subr.bf16.mxu0 %v1557
        %2324 = vmatpush1.bf16.msra.mxu0 %v1556
        %2325 = vmatprep.subr.bf16.mxu0 %v1553
        %2326 = vmatpush1.bf16.msra.mxu0 %v1552
        %2327 = vmatprep.subr.bf16.mxu0 %v1549
        %2328 = vmatpush1.bf16.msra.mxu0 %v1548
        %2329 = vmatprep.subr.bf16.mxu0 %v1545
        %2330 = vmatpush1.bf16.msra.mxu0 %v1544
        %2331 = vmatprep.subr.bf16.mxu0 %v1541
        %2332 = vmatpush1.bf16.msra.mxu0 %v1540
        %2333 = vmatprep.subr.bf16.mxu0 %v1537
        %2334 = vmatpush1.bf16.msra.mxu0 %v1536
        %2335 = vmatprep.subr.bf16.mxu0 %v1533
        %2336 = vmatpush1.bf16.msra.mxu0 %v1532
        %2337 = vmatprep.subr.bf16.mxu0 %v1593
        %2338 = vmatpush2.bf16.msra.mxu0 %v1592
        %2339 = vmatprep.subr.bf16.mxu0 %v1589
        %2340 = vmatpush2.bf16.msra.mxu0 %v1588
        %2341 = vmatprep.subr.bf16.mxu0 %v1585
        %2342 = vmatpush2.bf16.msra.mxu0 %v1584
        %2343 = vmatprep.subr.bf16.mxu0 %v1581
        %2344 = vmatpush2.bf16.msra.mxu0 %v1580
        %2345 = vmatprep.subr.bf16.mxu0 %v1577
        %2346 = vmatpush2.bf16.msra.mxu0 %v1576
        %2347 = vmatprep.subr.bf16.mxu0 %v1573
        %2348 = vmatpush2.bf16.msra.mxu0 %v1572
        %2349 = vmatprep.subr.bf16.mxu0 %v1569
        %2350 = vmatpush2.bf16.msra.mxu0 %v1568
        %2351 = vmatprep.subr.bf16.mxu0 %v1565
        %2352 = vmatpush2.bf16.msra.mxu0 %v1564
        %2353 = vmatprep.mubr.bf16.mxu0 %v649
        %2354 = vmatmul.mubr.bf16.gmra.mxu0 %v648
        %v2355 = vpop.f32.mrf.mxu0
        %v2356 = vadd.f32 0.0, %v2355
        %v2357 = vpop.f32.mrf.mxu0
        %v2358 = vadd.f32 0.0, %v2357
        %v2359 = vpop.f32.mrf.mxu0
        %v2360 = vadd.f32 0.0, %v2359
        %v2361 = vpop.f32.mrf.mxu0
        %v2362 = vadd.f32 0.0, %v2361
        %2363 = vdwg.mxu0
        %2364 = vmatprep.subr.bf16.mxu0 %v1625
        %2365 = vmatpush1.bf16.msra.mxu0 %v1624
        %2366 = vmatprep.subr.bf16.mxu0 %v1621
        %2367 = vmatpush1.bf16.msra.mxu0 %v1620
        %2368 = vmatprep.subr.bf16.mxu0 %v1617
        %2369 = vmatpush1.bf16.msra.mxu0 %v1616
        %2370 = vmatprep.subr.bf16.mxu0 %v1613
        %2371 = vmatpush1.bf16.msra.mxu0 %v1612
        %2372 = vmatprep.subr.bf16.mxu0 %v1609
        %2373 = vmatpush1.bf16.msra.mxu0 %v1608
        %2374 = vmatprep.subr.bf16.mxu0 %v1605
        %2375 = vmatpush1.bf16.msra.mxu0 %v1604
        %2376 = vmatprep.subr.bf16.mxu0 %v1601
        %2377 = vmatpush1.bf16.msra.mxu0 %v1600
        %2378 = vmatprep.subr.bf16.mxu0 %v1597
        %2379 = vmatpush1.bf16.msra.mxu0 %v1596
        %2380 = vmatprep.subr.bf16.mxu0 %v1657
        %2381 = vmatpush2.bf16.msra.mxu0 %v1656
        %2382 = vmatprep.subr.bf16.mxu0 %v1653
        %2383 = vmatpush2.bf16.msra.mxu0 %v1652
        %2384 = vmatprep.subr.bf16.mxu0 %v1649
        %2385 = vmatpush2.bf16.msra.mxu0 %v1648
        %2386 = vmatprep.subr.bf16.mxu0 %v1645
        %2387 = vmatpush2.bf16.msra.mxu0 %v1644
        %2388 = vmatprep.subr.bf16.mxu0 %v1641
        %2389 = vmatpush2.bf16.msra.mxu0 %v1640
        %2390 = vmatprep.subr.bf16.mxu0 %v1637
        %2391 = vmatpush2.bf16.msra.mxu0 %v1636
        %2392 = vmatprep.subr.bf16.mxu0 %v1633
        %2393 = vmatpush2.bf16.msra.mxu0 %v1632
        %2394 = vmatprep.subr.bf16.mxu0 %v1629
        %2395 = vmatpush2.bf16.msra.mxu0 %v1628
        %2396 = vmatprep.mubr.bf16.mxu0 %v651
        %2397 = vmatmul.mubr.bf16.gmra.mxu0 %v650
        %v2398 = vpop.f32.mrf.mxu0
        %v2399 = vadd.f32 %v2356, %v2398
        %v2400 = vpop.f32.mrf.mxu0
        %v2401 = vadd.f32 %v2358, %v2400
        %v2402 = vpop.f32.mrf.mxu0
        %v2403 = vadd.f32 %v2360, %v2402
        %v2404 = vpop.f32.mrf.mxu0
        %v2405 = vadd.f32 %v2362, %v2404
        %2406 = vdwg.mxu0
        %2407 = vmatprep.subr.bf16.mxu0 %v1689
        %2408 = vmatpush1.bf16.msra.mxu0 %v1688
        %2409 = vmatprep.subr.bf16.mxu0 %v1685
        %2410 = vmatpush1.bf16.msra.mxu0 %v1684
        %2411 = vmatprep.subr.bf16.mxu0 %v1681
        %2412 = vmatpush1.bf16.msra.mxu0 %v1680
        %2413 = vmatprep.subr.bf16.mxu0 %v1677
        %2414 = vmatpush1.bf16.msra.mxu0 %v1676
        %2415 = vmatprep.subr.bf16.mxu0 %v1673
        %2416 = vmatpush1.bf16.msra.mxu0 %v1672
        %2417 = vmatprep.subr.bf16.mxu0 %v1669
        %2418 = vmatpush1.bf16.msra.mxu0 %v1668
        %2419 = vmatprep.subr.bf16.mxu0 %v1665
        %2420 = vmatpush1.bf16.msra.mxu0 %v1664
        %2421 = vmatprep.subr.bf16.mxu0 %v1661
        %2422 = vmatpush1.bf16.msra.mxu0 %v1660
        %2423 = vmatprep.subr.bf16.mxu0 %v1721
        %2424 = vmatpush2.bf16.msra.mxu0 %v1720
        %2425 = vmatprep.subr.bf16.mxu0 %v1717
        %2426 = vmatpush2.bf16.msra.mxu0 %v1716
        %2427 = vmatprep.subr.bf16.mxu0 %v1713
        %2428 = vmatpush2.bf16.msra.mxu0 %v1712
        %2429 = vmatprep.subr.bf16.mxu0 %v1709
        %2430 = vmatpush2.bf16.msra.mxu0 %v1708
        %2431 = vmatprep.subr.bf16.mxu0 %v1705
        %2432 = vmatpush2.bf16.msra.mxu0 %v1704
        %2433 = vmatprep.subr.bf16.mxu0 %v1701
        %2434 = vmatpush2.bf16.msra.mxu0 %v1700
        %2435 = vmatprep.subr.bf16.mxu0 %v1697
        %2436 = vmatpush2.bf16.msra.mxu0 %v1696
        %2437 = vmatprep.subr.bf16.mxu0 %v1693
        %2438 = vmatpush2.bf16.msra.mxu0 %v1692
        %2439 = vmatprep.mubr.bf16.mxu0 %v653
        %2440 = vmatmul.mubr.bf16.gmra.mxu0 %v652
        %v2441 = vpop.f32.mrf.mxu0
        %v2442 = vadd.f32 %v2399, %v2441
        %v2443 = vpop.f32.mrf.mxu0
        %v2444 = vadd.f32 %v2401, %v2443
        %v2445 = vpop.f32.mrf.mxu0
        %v2446 = vadd.f32 %v2403, %v2445
        %v2447 = vpop.f32.mrf.mxu0
        %v2448 = vadd.f32 %v2405, %v2447
        %2449 = vdwg.mxu0
        %2450 = vmatprep.subr.bf16.mxu0 %v1753
        %2451 = vmatpush1.bf16.msra.mxu0 %v1752
        %2452 = vmatprep.subr.bf16.mxu0 %v1749
        %2453 = vmatpush1.bf16.msra.mxu0 %v1748
        %2454 = vmatprep.subr.bf16.mxu0 %v1745
        %2455 = vmatpush1.bf16.msra.mxu0 %v1744
        %2456 = vmatprep.subr.bf16.mxu0 %v1741
        %2457 = vmatpush1.bf16.msra.mxu0 %v1740
        %2458 = vmatprep.subr.bf16.mxu0 %v1737
        %2459 = vmatpush1.bf16.msra.mxu0 %v1736
        %2460 = vmatprep.subr.bf16.mxu0 %v1733
        %2461 = vmatpush1.bf16.msra.mxu0 %v1732
        %2462 = vmatprep.subr.bf16.mxu0 %v1729
        %2463 = vmatpush1.bf16.msra.mxu0 %v1728
        %2464 = vmatprep.subr.bf16.mxu0 %v1725
        %2465 = vmatpush1.bf16.msra.mxu0 %v1724
        %2466 = vmatprep.subr.bf16.mxu0 %v1785
        %2467 = vmatpush2.bf16.msra.mxu0 %v1784
        %2468 = vmatprep.subr.bf16.mxu0 %v1781
        %2469 = vmatpush2.bf16.msra.mxu0 %v1780
        %2470 = vmatprep.subr.bf16.mxu0 %v1777
        %2471 = vmatpush2.bf16.msra.mxu0 %v1776
        %2472 = vmatprep.subr.bf16.mxu0 %v1773
        %2473 = vmatpush2.bf16.msra.mxu0 %v1772
        %2474 = vmatprep.subr.bf16.mxu0 %v1769
        %2475 = vmatpush2.bf16.msra.mxu0 %v1768
        %2476 = vmatprep.subr.bf16.mxu0 %v1765
        %2477 = vmatpush2.bf16.msra.mxu0 %v1764
        %2478 = vmatprep.subr.bf16.mxu0 %v1761
        %2479 = vmatpush2.bf16.msra.mxu0 %v1760
        %2480 = vmatprep.subr.bf16.mxu0 %v1757
        %2481 = vmatpush2.bf16.msra.mxu0 %v1756
        %2482 = vmatprep.mubr.bf16.mxu0 %v655
        %2483 = vmatmul.mubr.bf16.gmra.mxu0 %v654
        %v2484 = vpop.f32.mrf.mxu0
        %v2485 = vadd.f32 %v2442, %v2484
        %v2486 = vpop.f32.mrf.mxu0
        %v2487 = vadd.f32 %v2444, %v2486
        %v2488 = vpop.f32.mrf.mxu0
        %v2489 = vadd.f32 %v2446, %v2488
        %v2490 = vpop.f32.mrf.mxu0
        %v2491 = vadd.f32 %v2448, %v2490
        %2492 = vdwg.mxu0
        %2493 = vmatprep.subr.bf16.mxu0 %v1817
        %2494 = vmatpush1.bf16.msra.mxu0 %v1816
        %2495 = vmatprep.subr.bf16.mxu0 %v1813
        %2496 = vmatpush1.bf16.msra.mxu0 %v1812
        %2497 = vmatprep.subr.bf16.mxu0 %v1809
        %2498 = vmatpush1.bf16.msra.mxu0 %v1808
        %2499 = vmatprep.subr.bf16.mxu0 %v1805
        %2500 = vmatpush1.bf16.msra.mxu0 %v1804
        %2501 = vmatprep.subr.bf16.mxu0 %v1801
        %2502 = vmatpush1.bf16.msra.mxu0 %v1800
        %2503 = vmatprep.subr.bf16.mxu0 %v1797
        %2504 = vmatpush1.bf16.msra.mxu0 %v1796
        %2505 = vmatprep.subr.bf16.mxu0 %v1793
        %2506 = vmatpush1.bf16.msra.mxu0 %v1792
        %2507 = vmatprep.subr.bf16.mxu0 %v1789
        %2508 = vmatpush1.bf16.msra.mxu0 %v1788
        %2509 = vmatprep.subr.bf16.mxu0 0
        %2510 = vmatpush2.bf16.msra.mxu0 0
        %2511 = vmatprep.subr.bf16.mxu0 0
        %2512 = vmatpush2.bf16.msra.mxu0 0
        %2513 = vmatprep.subr.bf16.mxu0 0
        %2514 = vmatpush2.bf16.msra.mxu0 0
        %2515 = vmatprep.subr.bf16.mxu0 0
        %2516 = vmatpush2.bf16.msra.mxu0 0
        %2517 = vmatprep.subr.bf16.mxu0 0
        %2518 = vmatpush2.bf16.msra.mxu0 0
        %2519 = vmatprep.subr.bf16.mxu0 0
        %2520 = vmatpush2.bf16.msra.mxu0 0
        %2521 = vmatprep.subr.bf16.mxu0 0
        %2522 = vmatpush2.bf16.msra.mxu0 0
        %2523 = vmatprep.subr.bf16.mxu0 0
        %2524 = vmatpush2.bf16.msra.mxu0 0
        %2525 = vmatprep.mubr.bf16.mxu0 0
        %2526 = vmatmul.mubr.bf16.gmra.mxu0 %v656
        %v2527 = vpop.f32.mrf.mxu0
        %v2528 = vadd.f32 %v2485, %v2527
        %v2529 = vpop.f32.mrf.mxu0
        %v2530 = vadd.f32 %v2487, %v2529
        %v2531 = vpop.f32.mrf.mxu0
        %v2532 = vadd.f32 %v2489, %v2531
        %v2533 = vpop.f32.mrf.mxu0
        %v2534 = vadd.f32 %v2491, %v2533
        %2535 = vdwg.mxu0
        %v2536 = vadd.f32 %v314, %v2313
        %v2537 = vadd.f32 %v315, %v2315
        %v2538 = vadd.f32 %v316, %v2528
        %v2539 = vadd.f32 %v317, %v2530
        %v2540 = vadd.f32 %v318, %v2317
        %v2541 = vadd.f32 %v319, %v2319
        %v2542 = vadd.f32 %v320, %v2532
        %v2543 = vadd.f32 %v321, %v2534
        %2544 = vst [vmem:[#allocation2] sm:$0xff] %v2536
        %2545 = vst [vmem:[#allocation2 + $0x8] sm:$0xff] %v2537
        %2546 = vst [vmem:[#allocation2 + $0x10] sm:$0xff] %v2538
        %2547 = vst [vmem:[#allocation2 + $0x18] sm:$0xff] %v2539
        %2548 = vst [vmem:[#allocation2 + $0x20] sm:$0xff] %v2540
        %2549 = vst [vmem:[#allocation2 + $0x28] sm:$0xff] %v2541
        %2550 = vst [vmem:[#allocation2 + $0x30] sm:$0xff] %v2542
        %2551 = vst [vmem:[#allocation2 + $0x38] sm:$0xff] %v2543
        %p2552 = scmp.eq.s32.totalorder %s26, 1
        // Predicated region
        $region61: #{tpu_custom_call.1} parent=39 // pred_check
          %p2553 = pneg %p2552
        $region62: #{tpu_custom_call.1} parent=39 // pred_check_branch
          %2555 = sbr.rel (%p2553) target = $region64
        $region63: #{tpu_custom_call.1} parent=39 // pred_region
          %v2556 = vld [vmem:[#allocation2] sm:$0xff]
          %v2557 = vld [vmem:[#allocation2 + $0x8] sm:$0xff]
          %v2558 = vld [vmem:[#allocation2 + $0x10] sm:$0xff]
          %v2559 = vld [vmem:[#allocation2 + $0x18] sm:$0xff]
          %v2560 = vld [vmem:[#allocation2 + $0x20] sm:$0xff]
          %v2561 = vld [vmem:[#allocation2 + $0x28] sm:$0xff]
          %v2562 = vld [vmem:[#allocation2 + $0x30] sm:$0xff]
          %v2563 = vld [vmem:[#allocation2 + $0x38] sm:$0xff]
          %v2564 = vld [vmem:[#allocation9] sm:$0xf]
          %v2566 = vlaneseq
          %v2567 = vshrl.u32 %v2566, 7
          %v2568 = vsub.s32 0, %v2567
          %v2569 = vrot.slane %v2564, %v2568
          %v2570 = vlaneseq
          %v2571 = vshrl.u32 %v2570, 7
          %v2572 = vsub.s32 1, %v2571
          %v2573 = vrot.slane %v2564, %v2572
          %v2574 = vlaneseq
          %v2575 = vshrl.u32 %v2574, 7
          %v2576 = vsub.s32 2, %v2575
          %v2577 = vrot.slane %v2564, %v2576
          %v2578 = vlaneseq
          %v2579 = vshrl.u32 %v2578, 7
          %v2580 = vsub.s32 3, %v2579
          %v2581 = vrot.slane %v2564, %v2580
          %v2586 = vadd.f32 %v2556, %v2569
          %v2587 = vadd.f32 %v2557, %v2573
          %v2588 = vadd.f32 %v2558, %v2577
          %v2589 = vadd.f32 %v2559, %v2581
          %v2590 = vadd.f32 %v2560, %v2569
          %v2591 = vadd.f32 %v2561, %v2573
          %v2592 = vadd.f32 %v2562, %v2577
          %v2593 = vadd.f32 %v2563, %v2581
          %v2594 = vmax.f32 %v2586, 0.0
          %v2595 = vmax.f32 %v2587, 0.0
          %v2596 = vmax.f32 %v2588, 0.0
          %v2597 = vmax.f32 %v2589, 0.0
          %v2598 = vmax.f32 %v2590, 0.0
          %v2599 = vmax.f32 %v2591, 0.0
          %v2600 = vmax.f32 %v2592, 0.0
          %v2601 = vmax.f32 %v2593, 0.0
          %v2602 = vld [vmem:[#allocation10] sm:$0xf]
          %v2604 = vlaneseq
          %v2605 = vshrl.u32 %v2604, 7
          %v2606 = vsub.s32 0, %v2605
          %v2607 = vrot.slane %v2602, %v2606
          %v2608 = vlaneseq
          %v2609 = vshrl.u32 %v2608, 7
          %v2610 = vsub.s32 1, %v2609
          %v2611 = vrot.slane %v2602, %v2610
          %v2612 = vlaneseq
          %v2613 = vshrl.u32 %v2612, 7
          %v2614 = vsub.s32 2, %v2613
          %v2615 = vrot.slane %v2602, %v2614
          %v2616 = vlaneseq
          %v2617 = vshrl.u32 %v2616, 7
          %v2618 = vsub.s32 3, %v2617
          %v2619 = vrot.slane %v2602, %v2618
          %v2624 = vmul.f32 %v2594, %v2607
          %v2625 = vmul.f32 %v2595, %v2611
          %v2626 = vmul.f32 %v2596, %v2615
          %v2627 = vmul.f32 %v2597, %v2619
          %v2628 = vmul.f32 %v2598, %v2607
          %v2629 = vmul.f32 %v2599, %v2611
          %v2630 = vmul.f32 %v2600, %v2615
          %v2631 = vmul.f32 %v2601, %v2619
          %v2632 = vadd.f32 %v2624, %v2625
          %v2633 = vadd.f32 %v2632, %v2626
          %v2634 = vadd.f32 %v2633, %v2627
          %2635 = vadd.xlane.f32.xlu0 %v2634
          %v2636 = vpop.xlane.xlu0 %2635
          %v2637 = vadd.f32 %v2628, %v2629
          %v2638 = vadd.f32 %v2637, %v2630
          %v2639 = vadd.f32 %v2638, %v2631
          %2640 = vadd.xlane.f32.xlu0 %v2639
          %v2641 = vpop.xlane.xlu0 %2640
          %v2642 = vld [vmem:[#allocation3] sm:$0x1]
          %v2644 = vlaneseq
          %v2645 = vshrl.u32 %v2644, 7
          %v2646 = vsub.s32 0, %v2645
          %v2647 = vrot.slane %v2642, %v2646
          %v2649 = vadd.f32 %v2636, %v2647
          %v2650 = vadd.f32 %v2641, %v2647
          %2652 = vset.pattern.permute.xlu0 0
          %2653 = vperm.xlu0 %2652, %v2649
          %v2654 = vpop.permute.xlu0 %2653
          %2657 = vset.pattern.permute.xlu0 0
          %2658 = vperm.xlu0 %2657, %v2650
          %v2659 = vpop.permute.xlu0 %2658
          %2661 = vst [vmem:[#allocation12] sm:$0xff] %v2654
          %2662 = vst [vmem:[#allocation12 + $0x8] sm:$0xff] %v2659
        $region64: #{tpu_custom_call.1} parent=39 // pred_fallthru
          _
        // Predicated region
        $region65: #{tpu_custom_call.1} parent=39 // pred_check
          %p2663 = pneg %p154
        $region66: #{tpu_custom_call.1} parent=39 // pred_check_branch
          %2665 = sbr.rel (%p2663) target = $region68
        $region67: #{tpu_custom_call.1} parent=39 // pred_region
          %s2667 = ssub.s32 256, 256
          %2668 = vsyncadd [#allocation6], %s2667
          %s2669 = sshll.u32 [#allocation12], 4
          %s2670 = int_to_ptr.vmem [resolvable:$true] %s2669
          %2675 = dma.vmem_to_hbm [thread:$0]  %s2670, 256, %s5, [#allocation6], 128, 128, 8
        $region68: #{tpu_custom_call.1} parent=39 // pred_fallthru
          _
        // Predicated region
        $region69: #{tpu_custom_call.1} parent=39 // pred_check
          %p2676 = pneg %p154
        $region70: #{tpu_custom_call.1} parent=39 // pred_check_branch
          %2678 = sbr.rel (%p2676) target = $region72
        $region71: #{tpu_custom_call.1} parent=39 // pred_region
          %2679 = dma.done [#allocation6], 256
        $region72: #{tpu_custom_call.1} parent=39 // pred_fallthru
          _
      $region40: #{tpu_custom_call.1} parent=5 // pred_fallthru
        _
      %p2680 = scmp.le.s32.totalorder 2, %s21
      // Predicated region
      $region73: #{tpu_custom_call.1} parent=5 // pred_check
        %p2681 = pneg %p2680
      $region74: #{tpu_custom_call.1} parent=5 // pred_check_branch
        %2683 = sbr.rel (%p2681) target = $region76
      $region75: #{tpu_custom_call.1} parent=5 // pred_region
        %s2684 = ssub.s32 %s21, 2
      $region76: #{tpu_custom_call.1} parent=5 // pred_fallthru
        _
    $region6: #{tpu_custom_call.1} parent=1 // loop_footer
      %s25 = sadd.s32 1, %s21
    $region7: #{tpu_custom_call.1} parent=1 // loop_footer_branch
      %20 = sbr.rel target = $region3
    $region8: #{tpu_custom_call.1} parent=1 // loop_exit
      _
    %2685 = vsyncpa [#allocation5], 1
    %s2686 = scalar_lea.sflag [#allocation5], 1
    %2687 = vsyncpa %s2686, 1
    %2688 = vsyncpa [#allocation8], 1
    %s2689 = scalar_lea.sflag [#allocation8], 1
    %2690 = vsyncpa %s2689, 1
    %2691 = vsyncpa [#allocation11], 1
    %2692 = vsyncpa [#allocation6], 1
    %s2693 = scalar_lea.sflag [#allocation6], 1
    %2694 = vsyncpa %s2693, 1

</llo_original>
